<compile_context>
chip_gen: v5e
topology: v5e:2x2
jax: 0.10.0
libtpu: 0.0.40
codegen_flags: <defaults>
</compile_context>

<pallas_src>
import jax
import jax.numpy as jnp
from jax.experimental import pallas as pl
from jax.experimental.pallas import tpu as pltpu


def _vq_kernel(xc_ref, w_ref, wt_ref, w2_ref, q_ref, idx_ref):
    """One lane-dense tile of tokens vs. the full codebook.

    xc_ref : (D, TN)  input tokens, tokens along lanes
    w_ref  : (K, D)   codebook (full, same block every grid step)
    wt_ref : (D, K)   pre-transposed codebook (hoisted out of the kernel)
    w2_ref : (K, 1)   precomputed per-code squared norms (hoisted)
    q_ref  : (D, TN)  quantized output tokens (lane-dense)
    idx_ref: (1, TN)  int32 nearest-code indices (lane-dense)
    """
    xc = xc_ref[...].astype(jnp.float32)        # (D, TN)
    w = w_ref[...].astype(jnp.float32)          # (K, D)
    w2 = w2_ref[...].astype(jnp.float32)        # (K, 1)

    # distances (up to a per-token constant): dist = ||w||^2 - 2 * W @ x
    wx = jnp.dot(w, xc, preferred_element_type=jnp.float32)      # (K, TN)
    dist = w2 - 2.0 * wx                                          # (K, TN)

    K = dist.shape[0]
    # argmin over the codebook (sublane) axis; first minimal index on ties,
    # matching torch.max(-dist, dim=1)[1] first-index behavior on CPU.
    min_d = jnp.min(dist, axis=0, keepdims=True)                  # (1, TN)
    row = jax.lax.broadcasted_iota(jnp.int32, dist.shape, 0)      # (K, TN)
    idx = jnp.min(jnp.where(dist == min_d, row, K), axis=0,
                  keepdims=True)                                  # (1, TN)
    idx_ref[...] = idx.astype(jnp.int32)

    # Gather codebook rows via W^T @ one-hot (MXU-friendly, no dynamic gather).
    onehot = (row == idx).astype(jnp.float32)                     # (K, TN)
    q = jnp.dot(wt_ref[...].astype(jnp.float32), onehot,
                preferred_element_type=jnp.float32)               # (D, TN)
    q_ref[...] = q.astype(q_ref.dtype)


def quantize_tokens(x_cols, weight, weight_t, w2, *, tile_n=512):
    """x_cols: (D, N); weight: (K, D); weight_t: (D, K); w2: (K, 1)."""
    D, N = x_cols.shape
    K = weight.shape[0]

    # Keep the tile lane-aligned but don't pad tiny inputs up to a huge block.
    tile_n = max(128, min(tile_n, ((N + 127) // 128) * 128))
    num_tiles = pl.cdiv(N, tile_n)
    n_pad = num_tiles * tile_n
    if n_pad != N:
        x_cols = jnp.pad(x_cols, ((0, 0), (0, n_pad - N)))

    q_cols, idx = pl.pallas_call(
        _vq_kernel,
        out_shape=(
            jax.ShapeDtypeStruct((D, n_pad), x_cols.dtype),
            jax.ShapeDtypeStruct((1, n_pad), jnp.int32),
        ),
        grid_spec=pltpu.PrefetchScalarGridSpec(
            num_scalar_prefetch=0,
            grid=(num_tiles,),
            in_specs=[
                pl.BlockSpec((D, tile_n), lambda i: (0, i)),   # token tile
                pl.BlockSpec((K, D), lambda i: (0, 0)),        # codebook
                pl.BlockSpec((D, K), lambda i: (0, 0)),        # codebook^T
                pl.BlockSpec((K, 1), lambda i: (0, 0)),        # ||w||^2
            ],
            out_specs=[
                pl.BlockSpec((D, tile_n), lambda i: (0, i)),
                pl.BlockSpec((1, tile_n), lambda i: (0, i)),
            ],
        ),
        compiler_params=pltpu.CompilerParams(
            dimension_semantics=("parallel",),
            # Actual per-step footprint is tiny (< 2 MiB for TN=512, K=128);
            # this cap stays within v7x's 64 MiB physical VMEM per core.
            vmem_limit_bytes=32 * 1024 * 1024,
        ),
    )(x_cols, weight, weight_t, w2)

    return q_cols[:, :N], idx[0, :N]


def quantize_forward(z, weight, *, tile_n=512):
    """Reproduces Quantize.forward (forward pass only).

    z      : (b, c, h, w) with c == code_dim  (NCHW, like PyTorch)
    weight : (size, code_dim) codebook

    Returns (quantized, straight_through, encoding_indices) with
    quantized / straight_through in NCHW and indices of shape (b, h, w).
    """
    b, c, h, w = z.shape
    size, code_dim = weight.shape
    assert c == code_dim

    # Tokens-on-lanes layout: (b, c, h, w) -> (c, b*h*w).  Token ordering along
    # the second axis is b-major then h then w, identical to PyTorch's
    # permute(0,2,3,1).view(-1, D) flatten.
    x_cols = jnp.transpose(z, (1, 0, 2, 3)).reshape(code_dim, -1)

    weight_f = weight.astype(jnp.float32)
    weight_t = weight_f.T                                        # (D, K)
    w2 = jnp.sum(weight_f * weight_f, axis=1, keepdims=True)     # (K, 1)

    q_cols, idx_flat = quantize_tokens(x_cols, weight_f, weight_t, w2,
                                       tile_n=tile_n)

    encoding_indices = idx_flat.reshape(b, h, w)
    quantized = jnp.transpose(q_cols.reshape(code_dim, b, h, w),
                              (1, 0, 2, 3)).astype(z.dtype)

    # (quantized - z).detach() + z  equals `quantized` in the forward pass.
    # TODO(synk): straight-through estimator gradient semantics are not
    # represented here (forward-only kernel).
    straight_through = jax.lax.stop_gradient(quantized - z) + z

    return quantized, straight_through, encoding_indices


def _reference_forward(z, weight):
    """Pure-JAX reference mirroring the PyTorch math, for verification."""
    b, c, h, w = z.shape
    flat = jnp.transpose(z, (0, 2, 3, 1)).reshape(-1, c)
    dist = (jnp.sum(flat ** 2, axis=1, keepdims=True)
            - 2.0 * flat @ weight.T
            + jnp.sum(weight.T ** 2, axis=0, keepdims=True))
    idx = jnp.argmax(-dist, axis=1)
    q = weight[idx].reshape(b, h, w, c)
    q = jnp.transpose(q, (0, 3, 1, 2))
    return q, idx.reshape(b, h, w)


if __name__ == "__main__":
    size = 128       # codebook entries
    code_dim = 8     # embedding dim (== channels)
    b, h, w = 2, 32, 32   # N = b*h*w = 2048 tokens -> 4 grid steps at tile_n=512

    key = jax.random.PRNGKey(0)
    k_w, k_z = jax.random.split(key)

    # nn.Embedding weight initialized uniform(-1/size, 1/size), deterministic.
    weight = jax.random.uniform(
        k_w, (size, code_dim), dtype=jnp.float32,
        minval=-1.0 / size, maxval=1.0 / size)

    z = jax.random.normal(k_z, (b, code_dim, h, w), dtype=jnp.float32) * 0.01

    quantized, ste, indices = quantize_forward(z, weight)
    jax.block_until_ready((quantized, ste, indices))

    # verify against pure-JAX reference
    q_ref, idx_ref = _reference_forward(z, weight)
    assert quantized.shape == (b, code_dim, h, w)
    assert ste.shape == (b, code_dim, h, w)
    assert indices.shape == (b, h, w)
    assert jnp.array_equal(indices, idx_ref)
    assert jnp.allclose(quantized, q_ref, atol=1e-6)
    assert jnp.allclose(ste, q_ref, atol=1e-6)

    print("KERNEL_OK")
</pallas_src>

<mosaic_0001>
module attributes {stable_mosaic.version = 11 : i64} {
  func.func @_vq_kernel(%arg0: i32, %arg1: memref<8x512xf32, #tpu.memory_space<vmem>>, %arg2: memref<128x8xf32, #tpu.memory_space<vmem>>, %arg3: memref<8x128xf32, #tpu.memory_space<vmem>>, %arg4: memref<128x1xf32, #tpu.memory_space<vmem>>, %arg5: memref<8x512xf32, #tpu.memory_space<vmem>>, %arg6: memref<1x512xi32, #tpu.memory_space<vmem>>) attributes {dimension_semantics = [#tpu.dimension_semantics<parallel>], iteration_bounds = array<i64: 4>, scalar_prefetch = 0 : i64, scratch_operands = 0 : i64, tpu.core_type = #tpu.core_type<tc>, window_params = [{transform_indices = @transform_0, window_bounds = array<i64: 8, 512>}, {pipeline_mode = #tpu.pipeline_mode<synchronous>, transform_indices = @transform_1, window_bounds = array<i64: 128, 8>}, {pipeline_mode = #tpu.pipeline_mode<synchronous>, transform_indices = @transform_2, window_bounds = array<i64: 8, 128>}, {pipeline_mode = #tpu.pipeline_mode<synchronous>, transform_indices = @transform_3, window_bounds = array<i64: 128, 1>}, {transform_indices = @transform_4, window_bounds = array<i64: 8, 512>}, {transform_indices = @transform_5, window_bounds = array<i64: 1, 512>}]} {
    %c0 = arith.constant 0 : index
    %c0_0 = arith.constant 0 : index
    %0 = vector.load %arg1[%c0, %c0_0] : memref<8x512xf32, #tpu.memory_space<vmem>>, vector<8x512xf32>
    %c0_1 = arith.constant 0 : index
    %c0_2 = arith.constant 0 : index
    %1 = vector.load %arg2[%c0_1, %c0_2] : memref<128x8xf32, #tpu.memory_space<vmem>>, vector<128x8xf32>
    %c0_3 = arith.constant 0 : index
    %c0_4 = arith.constant 0 : index
    %2 = vector.load %arg4[%c0_3, %c0_4] : memref<128x1xf32, #tpu.memory_space<vmem>>, vector<128x1xf32>
    %cst = arith.constant dense<0.000000e+00> : vector<128x512xf32>
    %3 = tpu.matmul %1, %0, %cst {dimension_numbers = #tpu.dot_dimension_numbers<[1], [0], [0], [1], [0, 0, 1, 1], [], []>} : vector<128x8xf32>, vector<8x512xf32>, vector<128x512xf32> -> vector<128x512xf32>
    %cst_5 = arith.constant 2.000000e+00 : f32
    %4 = vector.broadcast %cst_5 : f32 to vector<128x512xf32>
    %5 = arith.mulf %4, %3 : vector<128x512xf32>
    %6 = vector.broadcast %2 : vector<128x1xf32> to vector<128x512xf32>
    %7 = arith.subf %6, %5 : vector<128x512xf32>
    %cst_6 = arith.constant dense<0x7F800000> : vector<512xf32>
    %8 = vector.multi_reduction <minimumf>, %7, %cst_6 [0] : vector<128x512xf32> to vector<512xf32>
    %9 = vector.shape_cast %8 : vector<512xf32> to vector<1x512xf32>
    %10 = tpu.iota {dimensions = array<i32: 0>} : vector<128x512xi32>
    %11 = vector.broadcast %9 : vector<1x512xf32> to vector<128x512xf32>
    %12 = arith.cmpf oeq, %7, %11 : vector<128x512xf32>
    %c128_i32 = arith.constant 128 : i32
    %13 = vector.broadcast %c128_i32 : i32 to vector<128x512xi32>
    %14 = arith.select %12, %10, %13 : vector<128x512xi1>, vector<128x512xi32>
    %cst_7 = arith.constant dense<2147483647> : vector<512xi32>
    %15 = vector.multi_reduction <minsi>, %14, %cst_7 [0] : vector<128x512xi32> to vector<512xi32>
    %16 = vector.shape_cast %15 : vector<512xi32> to vector<1x512xi32>
    %c0_8 = arith.constant 0 : index
    %c0_9 = arith.constant 0 : index
    %17 = vector.load %arg6[%c0_8, %c0_9] : memref<1x512xi32, #tpu.memory_space<vmem>>, vector<1x512xi32>
    tpu.vector_store %arg6[%c0_8, %c0_9], %16 {strides = array<i32>} : memref<1x512xi32, #tpu.memory_space<vmem>>, vector<1x512xi32>,
    %18 = vector.broadcast %16 : vector<1x512xi32> to vector<128x512xi32>
    %19 = arith.cmpi eq, %10, %18 : vector<128x512xi32>
    %20 = arith.extui %19 : vector<128x512xi1> to vector<128x512xi32>
    %21 = arith.sitofp %20 : vector<128x512xi32> to vector<128x512xf32>
    %c0_10 = arith.constant 0 : index
    %c0_11 = arith.constant 0 : index
    %22 = vector.load %arg3[%c0_10, %c0_11] : memref<8x128xf32, #tpu.memory_space<vmem>>, vector<8x128xf32>
    %cst_12 = arith.constant dense<0.000000e+00> : vector<8x512xf32>
    %23 = tpu.matmul %22, %21, %cst_12 {dimension_numbers = #tpu.dot_dimension_numbers<[1], [0], [0], [1], [0, 0, 1, 1], [], []>} : vector<8x128xf32>, vector<128x512xf32>, vector<8x512xf32> -> vector<8x512xf32>
    %c0_13 = arith.constant 0 : index
    %c0_14 = arith.constant 0 : index
    %24 = vector.load %arg5[%c0_13, %c0_14] : memref<8x512xf32, #tpu.memory_space<vmem>>, vector<8x512xf32>
    tpu.vector_store %arg5[%c0_13, %c0_14], %23 {strides = array<i32>} : memref<8x512xf32, #tpu.memory_space<vmem>>, vector<8x512xf32>,
    return
  }
  func.func @transform_0(%arg0: i32) -> (i32, i32) {
    %c0_i32 = arith.constant 0 : i32
    %c0_i32_0 = arith.constant 0 : i32
    return %c0_i32, %arg0 : i32, i32
  }
  func.func @transform_1(%arg0: i32) -> (i32, i32) {
    %c0_i32 = arith.constant 0 : i32
    %c0_i32_0 = arith.constant 0 : i32
    %c0_i32_1 = arith.constant 0 : i32
    return %c0_i32, %c0_i32_0 : i32, i32
  }
  func.func @transform_2(%arg0: i32) -> (i32, i32) {
    %c0_i32 = arith.constant 0 : i32
    %c0_i32_0 = arith.constant 0 : i32
    %c0_i32_1 = arith.constant 0 : i32
    return %c0_i32, %c0_i32_0 : i32, i32
  }
  func.func @transform_3(%arg0: i32) -> (i32, i32) {
    %c0_i32 = arith.constant 0 : i32
    %c0_i32_0 = arith.constant 0 : i32
    %c0_i32_1 = arith.constant 0 : i32
    return %c0_i32, %c0_i32_0 : i32, i32
  }
  func.func @transform_4(%arg0: i32) -> (i32, i32) {
    %c0_i32 = arith.constant 0 : i32
    %c0_i32_0 = arith.constant 0 : i32
    return %c0_i32, %arg0 : i32, i32
  }
  func.func @transform_5(%arg0: i32) -> (i32, i32) {
    %c0_i32 = arith.constant 0 : i32
    %c0_i32_0 = arith.constant 0 : i32
    return %c0_i32, %arg0 : i32, i32
  }
}

</mosaic_0001>

<llo_original>
// kernel: tpu_custom_call.1
$region0: #{tpu_custom_call.1}
  #allocation0 [shape = 'u32[]', space=smem, size = 0x4, offset = 0x4, fixed_abs, tag = 'smem constant byte address 0x4 - core index']
  #allocation1 [shape = 'u32[72,128]{1,0:T(1,128)}', space=vmem, size = 0x9000, scoped, tag = 'internal scratch']
  %s0 = inlined_call_operand.vmem [shape: f32[8,2048], index: 0, kind: input, shape index: {}]
  %s1 = inlined_call_operand.vmem [shape: f32[128,8], index: 1, kind: input, shape index: {}]
  %s2 = inlined_call_operand.vmem [shape: f32[8,128], index: 2, kind: input, shape index: {}]
  %s3 = inlined_call_operand.vmem [shape: f32[128,1], index: 3, kind: input, shape index: {}]
  %s4 = inlined_call_operand.hbm [shape: f32[8,2048], index: 4, kind: output, shape index: {0}]
  %s5 = inlined_call_operand.hbm [shape: s32[1,2048], index: 5, kind: output, shape index: {1}]
  %6 = xla_tuple %s4, %s5
  %s7 = sld [smem:[#allocation0]]
  $region57: #{tpu_custom_call.1} parent=0
    _
  %s9 = ssub.s32 1, %s7
  %s10 = scalar_select 0, %s9, %s7
  $region1: #{tpu_custom_call.1} parent=0
    #allocation2 [shape = 'u8[32768]{0}', space=vmem, size = 0x8000, scoped, tag = 'output window, operand 0']
    #allocation3 [shape = 's32[2]{0}', space=sflag, size = 0x8, scoped, tag = 'scoped memory for tpu_custom_call.1']
    #allocation4 [shape = 'u8[4096]{0}', space=vmem, size = 0x1000, scoped, tag = 'output window, operand 1']
    #allocation5 [shape = 's32[2]{0}', space=sflag, size = 0x8, scoped, tag = 'scoped memory for tpu_custom_call.1']
    %11 = vsyncpa [#allocation3], 0
    %s12 = scalar_lea.sflag [#allocation3], 1
    %13 = vsyncpa %s12, 0
    %14 = vsyncpa [#allocation5], 0
    %s15 = scalar_lea.sflag [#allocation5], 1
    %16 = vsyncpa %s15, 0
    loop: start=0, step=1, limit=6
    $region2: #{tpu_custom_call.1} parent=1 // loop_pre_header
      _
    $region3: #{tpu_custom_call.1} parent=1 // loop_header
      %s18 = sphi 0, %s22
      %p19 = scmp.ge.s32.totalorder %s18, 6
      %s28 = sphi 0, %s30
      %s31 = sphi 0, %s28
      %s32 = sphi 0, %s31
      %s48 = sphi 0, %s32
      %s52 = sphi 0, %s52
      %s54 = sphi 0, %s52
      %s55 = sphi 0, %s54
      %s69 = sphi 0, %s55
      %s73 = sphi 0, %s73
      %s75 = sphi 0, %s73
      %s76 = sphi 0, %s75
      %s90 = sphi 0, %s76
      %s94 = sphi 0, %s94
      %s96 = sphi 0, %s94
      %s97 = sphi 0, %s96
      %s111 = sphi 0, %s97
      %s117 = sphi 0, %s119
      %s120 = sphi 0, %s117
      %s121 = sphi 0, %s120
      %s137 = sphi 0, %s121
      %s143 = sphi 0, %s145
      %s146 = sphi 0, %s143
      %s147 = sphi 0, %s146
      %s163 = sphi 0, %s147
    $region4: #{tpu_custom_call.1} parent=1 // loop_header_branch
      %21 = sbr.rel (%p19) target = $region8
    $region5: #{tpu_custom_call.1} parent=1 // loop_body
      %s23 = ssub.s32 %s18, 1
      %s24 = ssub.s32 %s18, 2
      %s25 = sadd.s32 %s18, 1
      %s26 = ssub.s32 %s18, %s25
      %p27 = scmp.eq.s32.totalorder %s26, 0
      %s29 = sadd.s32 %s28, 1
      %s30 = scalar_select %p27, %s28, %s29
      %p33 = pneg %p27
      %p34 = scmp.eq.s32.totalorder %s18, 3
      %p35 = por %p33, %p34
      %p36 = scmp.ne.s32.totalorder %s28, %s31
      %p37 = scmp.eq.s32.totalorder %s18, 0
      %p38 = por %p36, %p37
      %p39 = scmp.ne.s32.totalorder %s28, %s31
      %p40 = scmp.eq.s32.totalorder %s23, 3
      %p41 = por %p39, %p40
      %p42 = scmp.ne.s32.totalorder %s31, %s32
      %p43 = scmp.eq.s32.totalorder %s23, 0
      %p44 = por %p42, %p43
      %p45 = scmp.ne.s32.totalorder %s31, %s32
      %p46 = scmp.eq.s32.totalorder %s24, 3
      %p47 = por %p45, %p46
      %p49 = scmp.ne.s32.totalorder %s32, %s48
      %p50 = scmp.eq.s32.totalorder %s24, 0
      %p51 = por %p49, %p50
      %s53 = sadd.s32 %s52, 1
      %p56 = scmp.eq.s32.totalorder %s18, 3
      %p57 = scmp.ne.s32.totalorder %s52, %s54
      %p58 = scmp.eq.s32.totalorder %s18, 0
      %p59 = por %p57, %p58
      %p60 = scmp.ne.s32.totalorder %s52, %s54
      %p61 = scmp.eq.s32.totalorder %s23, 3
      %p62 = por %p60, %p61
      %p63 = scmp.ne.s32.totalorder %s54, %s55
      %p64 = scmp.eq.s32.totalorder %s23, 0
      %p65 = por %p63, %p64
      %p66 = scmp.ne.s32.totalorder %s54, %s55
      %p67 = scmp.eq.s32.totalorder %s24, 3
      %p68 = por %p66, %p67
      %p70 = scmp.ne.s32.totalorder %s55, %s69
      %p71 = scmp.eq.s32.totalorder %s24, 0
      %p72 = por %p70, %p71
      %s74 = sadd.s32 %s73, 1
      %p77 = scmp.eq.s32.totalorder %s18, 3
      %p78 = scmp.ne.s32.totalorder %s73, %s75
      %p79 = scmp.eq.s32.totalorder %s18, 0
      %p80 = por %p78, %p79
      %p81 = scmp.ne.s32.totalorder %s73, %s75
      %p82 = scmp.eq.s32.totalorder %s23, 3
      %p83 = por %p81, %p82
      %p84 = scmp.ne.s32.totalorder %s75, %s76
      %p85 = scmp.eq.s32.totalorder %s23, 0
      %p86 = por %p84, %p85
      %p87 = scmp.ne.s32.totalorder %s75, %s76
      %p88 = scmp.eq.s32.totalorder %s24, 3
      %p89 = por %p87, %p88
      %p91 = scmp.ne.s32.totalorder %s76, %s90
      %p92 = scmp.eq.s32.totalorder %s24, 0
      %p93 = por %p91, %p92
      %s95 = sadd.s32 %s94, 1
      %p98 = scmp.eq.s32.totalorder %s18, 3
      %p99 = scmp.ne.s32.totalorder %s94, %s96
      %p100 = scmp.eq.s32.totalorder %s18, 0
      %p101 = por %p99, %p100
      %p102 = scmp.ne.s32.totalorder %s94, %s96
      %p103 = scmp.eq.s32.totalorder %s23, 3
      %p104 = por %p102, %p103
      %p105 = scmp.ne.s32.totalorder %s96, %s97
      %p106 = scmp.eq.s32.totalorder %s23, 0
      %p107 = por %p105, %p106
      %p108 = scmp.ne.s32.totalorder %s96, %s97
      %p109 = scmp.eq.s32.totalorder %s24, 3
      %p110 = por %p108, %p109
      %p112 = scmp.ne.s32.totalorder %s97, %s111
      %p113 = scmp.eq.s32.totalorder %s24, 0
      %p114 = por %p112, %p113
      %s115 = ssub.s32 %s18, %s25
      %p116 = scmp.eq.s32.totalorder %s115, 0
      %s118 = sadd.s32 %s117, 1
      %s119 = scalar_select %p116, %s117, %s118
      %p122 = pneg %p116
      %p123 = scmp.eq.s32.totalorder %s18, 3
      %p124 = por %p122, %p123
      %p125 = scmp.ne.s32.totalorder %s117, %s120
      %p126 = scmp.eq.s32.totalorder %s18, 0
      %p127 = por %p125, %p126
      %p128 = scmp.ne.s32.totalorder %s117, %s120
      %p129 = scmp.eq.s32.totalorder %s23, 3
      %p130 = por %p128, %p129
      %p131 = scmp.ne.s32.totalorder %s120, %s121
      %p132 = scmp.eq.s32.totalorder %s23, 0
      %p133 = por %p131, %p132
      %p134 = scmp.ne.s32.totalorder %s120, %s121
      %p135 = scmp.eq.s32.totalorder %s24, 3
      %p136 = por %p134, %p135
      %p138 = scmp.ne.s32.totalorder %s121, %s137
      %p139 = scmp.eq.s32.totalorder %s24, 0
      %p140 = por %p138, %p139
      %s141 = ssub.s32 %s18, %s25
      %p142 = scmp.eq.s32.totalorder %s141, 0
      %s144 = sadd.s32 %s143, 1
      %s145 = scalar_select %p142, %s143, %s144
      %p148 = pneg %p142
      %p149 = scmp.eq.s32.totalorder %s18, 3
      %p150 = por %p148, %p149
      %p151 = scmp.ne.s32.totalorder %s143, %s146
      %p152 = scmp.eq.s32.totalorder %s18, 0
      %p153 = por %p151, %p152
      %p154 = scmp.ne.s32.totalorder %s143, %s146
      %p155 = scmp.eq.s32.totalorder %s23, 3
      %p156 = por %p154, %p155
      %p157 = scmp.ne.s32.totalorder %s146, %s147
      %p158 = scmp.eq.s32.totalorder %s23, 0
      %p159 = por %p157, %p158
      %p160 = scmp.ne.s32.totalorder %s146, %s147
      %p161 = scmp.eq.s32.totalorder %s24, 3
      %p162 = por %p160, %p161
      %p164 = scmp.ne.s32.totalorder %s147, %s163
      %p165 = scmp.eq.s32.totalorder %s24, 0
      %p166 = por %p164, %p165
      %p167 = scmp.le.s32.totalorder 1, %s18
      %p168 = scmp.lt.s32.totalorder %s18, 5
      %p169 = pnand %p167, %p168
      %p170 = pneg %p169
      // Predicated region
      $region9: #{tpu_custom_call.1} parent=5 // pred_check
        _
      $region10: #{tpu_custom_call.1} parent=5 // pred_check_branch
        %172 = sbr.rel (%p169) target = $region12
      $region11: #{tpu_custom_call.1} parent=5 // pred_region
        %s173 = ssub.s32 %s18, 1
        // Predicated region
        $region13: #{tpu_custom_call.1} parent=11 // pred_check
          %p174 = pneg %p65
        $region14: #{tpu_custom_call.1} parent=11 // pred_check_branch
          %176 = sbr.rel (%p174) target = $region16
        $region15: #{tpu_custom_call.1} parent=11 // pred_region
          _
        $region16: #{tpu_custom_call.1} parent=11 // pred_fallthru
          _
        // Predicated region
        $region17: #{tpu_custom_call.1} parent=11 // pred_check
          %p177 = pneg %p86
        $region18: #{tpu_custom_call.1} parent=11 // pred_check_branch
          %179 = sbr.rel (%p177) target = $region20
        $region19: #{tpu_custom_call.1} parent=11 // pred_region
          _
        $region20: #{tpu_custom_call.1} parent=11 // pred_fallthru
          _
        // Predicated region
        $region21: #{tpu_custom_call.1} parent=11 // pred_check
          %p180 = pneg %p107
        $region22: #{tpu_custom_call.1} parent=11 // pred_check_branch
          %182 = sbr.rel (%p180) target = $region24
        $region23: #{tpu_custom_call.1} parent=11 // pred_region
          _
        $region24: #{tpu_custom_call.1} parent=11 // pred_fallthru
          _
      $region12: #{tpu_custom_call.1} parent=5 // pred_fallthru
        _
      %p183 = scmp.lt.s32.totalorder %s18, 4
      // Predicated region
      $region25: #{tpu_custom_call.1} parent=5 // pred_check
        %p184 = pneg %p183
      $region26: #{tpu_custom_call.1} parent=5 // pred_check_branch
        %186 = sbr.rel (%p184) target = $region28
      $region27: #{tpu_custom_call.1} parent=5 // pred_region
        // Predicated region
        $region29: #{tpu_custom_call.1} parent=27 // pred_check
          %p187 = pneg %p38
        $region30: #{tpu_custom_call.1} parent=27 // pred_check_branch
          %189 = sbr.rel (%p187) target = $region32
        $region31: #{tpu_custom_call.1} parent=27 // pred_region
          %s190 = smul.u32 4, %s18
          %p191 = scmp.lt.s32.totalorder %s190, 15
          %s192 = scalar_select %p191, %s190, 15
          %s193 = smul.addr %s192, 8
          %s194 = scalar_lea.vmem %s0, %s193
          %s195 = smul.u32 4, %s18
        $region32: #{tpu_custom_call.1} parent=27 // pred_fallthru
          _
      $region28: #{tpu_custom_call.1} parent=5 // pred_fallthru
        _
      %p196 = scmp.le.s32.totalorder 1, %s18
      %p197 = scmp.lt.s32.totalorder %s18, 5
      %p198 = pnand %p196, %p197
      %p199 = pneg %p198
      // Predicated region
      $region33: #{tpu_custom_call.1} parent=5 // pred_check
        _
      $region34: #{tpu_custom_call.1} parent=5 // pred_check_branch
        %201 = sbr.rel (%p198) target = $region36
      $region35: #{tpu_custom_call.1} parent=5 // pred_region
        %s202 = ssub.s32 %s18, 1
        %s203 = smul.u32 4, %s23
        %p204 = scmp.lt.s32.totalorder %s203, 15
        %s205 = scalar_select %p204, %s203, 15
        %s206 = smul.addr %s205, 8
        %s207 = scalar_lea.vmem %s0, %s206
        %p208 = pneg %p44
        %p209 = pneg %p41
        %p210 = pneg %p65
        %p211 = pneg %p62
        %p212 = pneg %p86
        %p213 = pneg %p83
        %p214 = pneg %p107
        %p215 = pneg %p104
        %p216 = pneg %p133
        %p217 = pneg %p130
        %s218 = sand.u32 %s120, 1
        %s219 = scalar_lea.sflag [#allocation3], %s218
        %s220 = sand.u32 %s120, 1
        %s221 = smul.addr %s220, 32
        %s222 = scalar_lea.vmem [#allocation2], %s221
        %p223 = pneg %p159
        %p224 = pneg %p156
        %s225 = sand.u32 %s146, 1
        %s226 = scalar_lea.sflag [#allocation5], %s225
        %s227 = sand.u32 %s146, 1
        %s228 = smul.addr %s227, 4
        %s229 = scalar_lea.vmem [#allocation4], %s228
        %s230 = smul.u32 4, %s23
        %p231 = scmp.lt.s32.totalorder %s230, 15
        %s232 = scalar_select %p231, %s230, 15
        %s233 = smul.addr %s232, 8
        %s234 = scalar_lea.vmem %s0, %s233
        %s235 = smul.u32 4, %s23
        %s236 = smul.u32 4, %s23
        %s237 = smul.u32 4, %s23
        %v238 = vld [vmem:[%s234] sm:$0xff]
        %v239 = vld [vmem:[%s234 + $0x8] sm:$0xff]
        %v240 = vld [vmem:[%s234 + $0x10] sm:$0xff]
        %v241 = vld [vmem:[%s234 + $0x18] sm:$0xff]
        %v242 = vld [vmem:[%s1] sm:$0xff]
        %v243 = vld [vmem:[%s1 + $0x8] sm:$0xff]
        %v244 = vld [vmem:[%s1 + $0x10] sm:$0xff]
        %v245 = vld [vmem:[%s1 + $0x18] sm:$0xff]
        %v246 = vld [vmem:[%s1 + $0x20] sm:$0xff]
        %v247 = vld [vmem:[%s1 + $0x28] sm:$0xff]
        %v248 = vld [vmem:[%s1 + $0x30] sm:$0xff]
        %v249 = vld [vmem:[%s1 + $0x38] sm:$0xff]
        %v250 = vld [vmem:[%s1 + $0x40] sm:$0xff]
        %v251 = vld [vmem:[%s1 + $0x48] sm:$0xff]
        %v252 = vld [vmem:[%s1 + $0x50] sm:$0xff]
        %v253 = vld [vmem:[%s1 + $0x58] sm:$0xff]
        %v254 = vld [vmem:[%s1 + $0x60] sm:$0xff]
        %v255 = vld [vmem:[%s1 + $0x68] sm:$0xff]
        %v256 = vld [vmem:[%s1 + $0x70] sm:$0xff]
        %v257 = vld [vmem:[%s1 + $0x78] sm:$0xff]
        %v258 = vld [vmem:[%s3] sm:$0xff]
        %v259 = vld [vmem:[%s3 + $0x8] sm:$0xff]
        %v260 = vld [vmem:[%s3 + $0x10] sm:$0xff]
        %v261 = vld [vmem:[%s3 + $0x18] sm:$0xff]
        %v262 = vld [vmem:[%s3 + $0x20] sm:$0xff]
        %v263 = vld [vmem:[%s3 + $0x28] sm:$0xff]
        %v264 = vld [vmem:[%s3 + $0x30] sm:$0xff]
        %v265 = vld [vmem:[%s3 + $0x38] sm:$0xff]
        %v266 = vld [vmem:[%s3 + $0x40] sm:$0xff]
        %v267 = vld [vmem:[%s3 + $0x48] sm:$0xff]
        %v268 = vld [vmem:[%s3 + $0x50] sm:$0xff]
        %v269 = vld [vmem:[%s3 + $0x58] sm:$0xff]
        %v270 = vld [vmem:[%s3 + $0x60] sm:$0xff]
        %v271 = vld [vmem:[%s3 + $0x68] sm:$0xff]
        %v272 = vld [vmem:[%s3 + $0x70] sm:$0xff]
        %v273 = vld [vmem:[%s3 + $0x78] sm:$0xff]
        %vm274 = vcmask 64512
        %v276 = vsel %vm274, %v242, 0
        %v279 = vsel %vm274, %v243, 0
        %v282 = vsel %vm274, %v244, 0
        %v285 = vsel %vm274, %v245, 0
        %v288 = vsel %vm274, %v246, 0
        %v291 = vsel %vm274, %v247, 0
        %v294 = vsel %vm274, %v248, 0
        %v297 = vsel %vm274, %v249, 0
        %v300 = vsel %vm274, %v250, 0
        %v303 = vsel %vm274, %v251, 0
        %v306 = vsel %vm274, %v252, 0
        %v309 = vsel %vm274, %v253, 0
        %v312 = vsel %vm274, %v254, 0
        %v315 = vsel %vm274, %v255, 0
        %v318 = vsel %vm274, %v256, 0
        %v321 = vsel %vm274, %v257, 0
        %323 = vmatpush.msra.mxu0 0.0
        %324 = vmatpush.msra.mxu0 0.0
        %325 = vmatpush.msra.mxu0 0.0
        %326 = vmatpush.msra.mxu0 0.0
        %327 = vmatpush.msra.mxu0 0.0
        %328 = vmatpush.msra.mxu0 0.0
        %329 = vmatpush.msra.mxu0 0.0
        %330 = vmatpush.msra.mxu0 0.0
        %331 = vmatpush.msra.mxu0 0.0
        %332 = vmatpush.msra.mxu0 0.0
        %333 = vmatpush.msra.mxu0 0.0
        %334 = vmatpush.msra.mxu0 0.0
        %335 = vmatpush.msra.mxu0 0.0
        %336 = vmatpush.msra.mxu0 0.0
        %337 = vmatpush.msra.mxu0 0.0
        %338 = vmatpush.msra.mxu0 %v238
        %339 = vmatmul.f32.gmra.mxu0 %v276
        %v340 = vpop.f32.mrf.mxu0
        %v341 = vadd.f32 0.0, %v340
        %342 = vmatmul.f32.gmra.mxu0 %v279
        %v343 = vpop.f32.mrf.mxu0
        %v344 = vadd.f32 0.0, %v343
        %345 = vmatmul.f32.gmra.mxu0 %v282
        %v346 = vpop.f32.mrf.mxu0
        %v347 = vadd.f32 0.0, %v346
        %348 = vmatmul.f32.gmra.mxu0 %v285
        %v349 = vpop.f32.mrf.mxu0
        %v350 = vadd.f32 0.0, %v349
        %351 = vmatmul.f32.gmra.mxu0 %v288
        %v352 = vpop.f32.mrf.mxu0
        %v353 = vadd.f32 0.0, %v352
        %354 = vmatmul.f32.gmra.mxu0 %v291
        %v355 = vpop.f32.mrf.mxu0
        %v356 = vadd.f32 0.0, %v355
        %357 = vmatmul.f32.gmra.mxu0 %v294
        %v358 = vpop.f32.mrf.mxu0
        %v359 = vadd.f32 0.0, %v358
        %360 = vmatmul.f32.gmra.mxu0 %v297
        %v361 = vpop.f32.mrf.mxu0
        %v362 = vadd.f32 0.0, %v361
        %363 = vmatmul.f32.gmra.mxu0 %v300
        %v364 = vpop.f32.mrf.mxu0
        %v365 = vadd.f32 0.0, %v364
        %366 = vmatmul.f32.gmra.mxu0 %v303
        %v367 = vpop.f32.mrf.mxu0
        %v368 = vadd.f32 0.0, %v367
        %369 = vmatmul.f32.gmra.mxu0 %v306
        %v370 = vpop.f32.mrf.mxu0
        %v371 = vadd.f32 0.0, %v370
        %372 = vmatmul.f32.gmra.mxu0 %v309
        %v373 = vpop.f32.mrf.mxu0
        %v374 = vadd.f32 0.0, %v373
        %375 = vmatmul.f32.gmra.mxu0 %v312
        %v376 = vpop.f32.mrf.mxu0
        %v377 = vadd.f32 0.0, %v376
        %378 = vmatmul.f32.gmra.mxu0 %v315
        %v379 = vpop.f32.mrf.mxu0
        %v380 = vadd.f32 0.0, %v379
        %381 = vmatmul.f32.gmra.mxu0 %v318
        %v382 = vpop.f32.mrf.mxu0
        %v383 = vadd.f32 0.0, %v382
        %384 = vmatmul.f32.gmra.mxu0 %v321
        %v385 = vpop.f32.mrf.mxu0
        %v386 = vadd.f32 0.0, %v385
        %387 = vdwg.mxu0
        %388 = vmatpush.msra.mxu0 0.0
        %389 = vmatpush.msra.mxu0 0.0
        %390 = vmatpush.msra.mxu0 0.0
        %391 = vmatpush.msra.mxu0 0.0
        %392 = vmatpush.msra.mxu0 0.0
        %393 = vmatpush.msra.mxu0 0.0
        %394 = vmatpush.msra.mxu0 0.0
        %395 = vmatpush.msra.mxu0 0.0
        %396 = vmatpush.msra.mxu0 0.0
        %397 = vmatpush.msra.mxu0 0.0
        %398 = vmatpush.msra.mxu0 0.0
        %399 = vmatpush.msra.mxu0 0.0
        %400 = vmatpush.msra.mxu0 0.0
        %401 = vmatpush.msra.mxu0 0.0
        %402 = vmatpush.msra.mxu0 0.0
        %403 = vmatpush.msra.mxu0 %v239
        %404 = vmatmul.f32.gmra.mxu0 %v276
        %v405 = vpop.f32.mrf.mxu0
        %v406 = vadd.f32 0.0, %v405
        %407 = vmatmul.f32.gmra.mxu0 %v279
        %v408 = vpop.f32.mrf.mxu0
        %v409 = vadd.f32 0.0, %v408
        %410 = vmatmul.f32.gmra.mxu0 %v282
        %v411 = vpop.f32.mrf.mxu0
        %v412 = vadd.f32 0.0, %v411
        %413 = vmatmul.f32.gmra.mxu0 %v285
        %v414 = vpop.f32.mrf.mxu0
        %v415 = vadd.f32 0.0, %v414
        %416 = vmatmul.f32.gmra.mxu0 %v288
        %v417 = vpop.f32.mrf.mxu0
        %v418 = vadd.f32 0.0, %v417
        %419 = vmatmul.f32.gmra.mxu0 %v291
        %v420 = vpop.f32.mrf.mxu0
        %v421 = vadd.f32 0.0, %v420
        %422 = vmatmul.f32.gmra.mxu0 %v294
        %v423 = vpop.f32.mrf.mxu0
        %v424 = vadd.f32 0.0, %v423
        %425 = vmatmul.f32.gmra.mxu0 %v297
        %v426 = vpop.f32.mrf.mxu0
        %v427 = vadd.f32 0.0, %v426
        %428 = vmatmul.f32.gmra.mxu0 %v300
        %v429 = vpop.f32.mrf.mxu0
        %v430 = vadd.f32 0.0, %v429
        %431 = vmatmul.f32.gmra.mxu0 %v303
        %v432 = vpop.f32.mrf.mxu0
        %v433 = vadd.f32 0.0, %v432
        %434 = vmatmul.f32.gmra.mxu0 %v306
        %v435 = vpop.f32.mrf.mxu0
        %v436 = vadd.f32 0.0, %v435
        %437 = vmatmul.f32.gmra.mxu0 %v309
        %v438 = vpop.f32.mrf.mxu0
        %v439 = vadd.f32 0.0, %v438
        %440 = vmatmul.f32.gmra.mxu0 %v312
        %v441 = vpop.f32.mrf.mxu0
        %v442 = vadd.f32 0.0, %v441
        %443 = vmatmul.f32.gmra.mxu0 %v315
        %v444 = vpop.f32.mrf.mxu0
        %v445 = vadd.f32 0.0, %v444
        %446 = vmatmul.f32.gmra.mxu0 %v318
        %v447 = vpop.f32.mrf.mxu0
        %v448 = vadd.f32 0.0, %v447
        %449 = vmatmul.f32.gmra.mxu0 %v321
        %v450 = vpop.f32.mrf.mxu0
        %v451 = vadd.f32 0.0, %v450
        %452 = vdwg.mxu0
        %453 = vmatpush.msra.mxu0 0.0
        %454 = vmatpush.msra.mxu0 0.0
        %455 = vmatpush.msra.mxu0 0.0
        %456 = vmatpush.msra.mxu0 0.0
        %457 = vmatpush.msra.mxu0 0.0
        %458 = vmatpush.msra.mxu0 0.0
        %459 = vmatpush.msra.mxu0 0.0
        %460 = vmatpush.msra.mxu0 0.0
        %461 = vmatpush.msra.mxu0 0.0
        %462 = vmatpush.msra.mxu0 0.0
        %463 = vmatpush.msra.mxu0 0.0
        %464 = vmatpush.msra.mxu0 0.0
        %465 = vmatpush.msra.mxu0 0.0
        %466 = vmatpush.msra.mxu0 0.0
        %467 = vmatpush.msra.mxu0 0.0
        %468 = vmatpush.msra.mxu0 %v240
        %469 = vmatmul.f32.gmra.mxu0 %v276
        %v470 = vpop.f32.mrf.mxu0
        %v471 = vadd.f32 0.0, %v470
        %472 = vmatmul.f32.gmra.mxu0 %v279
        %v473 = vpop.f32.mrf.mxu0
        %v474 = vadd.f32 0.0, %v473
        %475 = vmatmul.f32.gmra.mxu0 %v282
        %v476 = vpop.f32.mrf.mxu0
        %v477 = vadd.f32 0.0, %v476
        %478 = vmatmul.f32.gmra.mxu0 %v285
        %v479 = vpop.f32.mrf.mxu0
        %v480 = vadd.f32 0.0, %v479
        %481 = vmatmul.f32.gmra.mxu0 %v288
        %v482 = vpop.f32.mrf.mxu0
        %v483 = vadd.f32 0.0, %v482
        %484 = vmatmul.f32.gmra.mxu0 %v291
        %v485 = vpop.f32.mrf.mxu0
        %v486 = vadd.f32 0.0, %v485
        %487 = vmatmul.f32.gmra.mxu0 %v294
        %v488 = vpop.f32.mrf.mxu0
        %v489 = vadd.f32 0.0, %v488
        %490 = vmatmul.f32.gmra.mxu0 %v297
        %v491 = vpop.f32.mrf.mxu0
        %v492 = vadd.f32 0.0, %v491
        %493 = vmatmul.f32.gmra.mxu0 %v300
        %v494 = vpop.f32.mrf.mxu0
        %v495 = vadd.f32 0.0, %v494
        %496 = vmatmul.f32.gmra.mxu0 %v303
        %v497 = vpop.f32.mrf.mxu0
        %v498 = vadd.f32 0.0, %v497
        %499 = vmatmul.f32.gmra.mxu0 %v306
        %v500 = vpop.f32.mrf.mxu0
        %v501 = vadd.f32 0.0, %v500
        %502 = vmatmul.f32.gmra.mxu0 %v309
        %v503 = vpop.f32.mrf.mxu0
        %v504 = vadd.f32 0.0, %v503
        %505 = vmatmul.f32.gmra.mxu0 %v312
        %v506 = vpop.f32.mrf.mxu0
        %v507 = vadd.f32 0.0, %v506
        %508 = vmatmul.f32.gmra.mxu0 %v315
        %v509 = vpop.f32.mrf.mxu0
        %v510 = vadd.f32 0.0, %v509
        %511 = vmatmul.f32.gmra.mxu0 %v318
        %v512 = vpop.f32.mrf.mxu0
        %v513 = vadd.f32 0.0, %v512
        %514 = vmatmul.f32.gmra.mxu0 %v321
        %v515 = vpop.f32.mrf.mxu0
        %v516 = vadd.f32 0.0, %v515
        %517 = vdwg.mxu0
        %518 = vmatpush.msra.mxu0 0.0
        %519 = vmatpush.msra.mxu0 0.0
        %520 = vmatpush.msra.mxu0 0.0
        %521 = vmatpush.msra.mxu0 0.0
        %522 = vmatpush.msra.mxu0 0.0
        %523 = vmatpush.msra.mxu0 0.0
        %524 = vmatpush.msra.mxu0 0.0
        %525 = vmatpush.msra.mxu0 0.0
        %526 = vmatpush.msra.mxu0 0.0
        %527 = vmatpush.msra.mxu0 0.0
        %528 = vmatpush.msra.mxu0 0.0
        %529 = vmatpush.msra.mxu0 0.0
        %530 = vmatpush.msra.mxu0 0.0
        %531 = vmatpush.msra.mxu0 0.0
        %532 = vmatpush.msra.mxu0 0.0
        %533 = vmatpush.msra.mxu0 %v241
        %534 = vmatmul.f32.gmra.mxu0 %v276
        %v535 = vpop.f32.mrf.mxu0
        %v536 = vadd.f32 0.0, %v535
        %537 = vmatmul.f32.gmra.mxu0 %v279
        %v538 = vpop.f32.mrf.mxu0
        %v539 = vadd.f32 0.0, %v538
        %540 = vmatmul.f32.gmra.mxu0 %v282
        %v541 = vpop.f32.mrf.mxu0
        %v542 = vadd.f32 0.0, %v541
        %543 = vmatmul.f32.gmra.mxu0 %v285
        %v544 = vpop.f32.mrf.mxu0
        %v545 = vadd.f32 0.0, %v544
        %546 = vmatmul.f32.gmra.mxu0 %v288
        %v547 = vpop.f32.mrf.mxu0
        %v548 = vadd.f32 0.0, %v547
        %549 = vmatmul.f32.gmra.mxu0 %v291
        %v550 = vpop.f32.mrf.mxu0
        %v551 = vadd.f32 0.0, %v550
        %552 = vmatmul.f32.gmra.mxu0 %v294
        %v553 = vpop.f32.mrf.mxu0
        %v554 = vadd.f32 0.0, %v553
        %555 = vmatmul.f32.gmra.mxu0 %v297
        %v556 = vpop.f32.mrf.mxu0
        %v557 = vadd.f32 0.0, %v556
        %558 = vmatmul.f32.gmra.mxu0 %v300
        %v559 = vpop.f32.mrf.mxu0
        %v560 = vadd.f32 0.0, %v559
        %561 = vmatmul.f32.gmra.mxu0 %v303
        %v562 = vpop.f32.mrf.mxu0
        %v563 = vadd.f32 0.0, %v562
        %564 = vmatmul.f32.gmra.mxu0 %v306
        %v565 = vpop.f32.mrf.mxu0
        %v566 = vadd.f32 0.0, %v565
        %567 = vmatmul.f32.gmra.mxu0 %v309
        %v568 = vpop.f32.mrf.mxu0
        %v569 = vadd.f32 0.0, %v568
        %570 = vmatmul.f32.gmra.mxu0 %v312
        %v571 = vpop.f32.mrf.mxu0
        %v572 = vadd.f32 0.0, %v571
        %573 = vmatmul.f32.gmra.mxu0 %v315
        %v574 = vpop.f32.mrf.mxu0
        %v575 = vadd.f32 0.0, %v574
        %576 = vmatmul.f32.gmra.mxu0 %v318
        %v577 = vpop.f32.mrf.mxu0
        %v578 = vadd.f32 0.0, %v577
        %579 = vmatmul.f32.gmra.mxu0 %v321
        %v580 = vpop.f32.mrf.mxu0
        %v581 = vadd.f32 0.0, %v580
        %582 = vdwg.mxu0
        %v583 = vmul.f32 %v341, 2.0
        %v584 = vmul.f32 %v406, 2.0
        %v585 = vmul.f32 %v471, 2.0
        %v586 = vmul.f32 %v536, 2.0
        %v587 = vmul.f32 %v344, 2.0
        %v588 = vmul.f32 %v409, 2.0
        %v589 = vmul.f32 %v474, 2.0
        %v590 = vmul.f32 %v539, 2.0
        %v591 = vmul.f32 %v347, 2.0
        %v592 = vmul.f32 %v412, 2.0
        %v593 = vmul.f32 %v477, 2.0
        %v594 = vmul.f32 %v542, 2.0
        %v595 = vmul.f32 %v350, 2.0
        %v596 = vmul.f32 %v415, 2.0
        %v597 = vmul.f32 %v480, 2.0
        %v598 = vmul.f32 %v545, 2.0
        %v599 = vmul.f32 %v353, 2.0
        %v600 = vmul.f32 %v418, 2.0
        %v601 = vmul.f32 %v483, 2.0
        %v602 = vmul.f32 %v548, 2.0
        %v603 = vmul.f32 %v356, 2.0
        %v604 = vmul.f32 %v421, 2.0
        %v605 = vmul.f32 %v486, 2.0
        %v606 = vmul.f32 %v551, 2.0
        %v607 = vmul.f32 %v359, 2.0
        %v608 = vmul.f32 %v424, 2.0
        %v609 = vmul.f32 %v489, 2.0
        %v610 = vmul.f32 %v554, 2.0
        %v611 = vmul.f32 %v362, 2.0
        %v612 = vmul.f32 %v427, 2.0
        %v613 = vmul.f32 %v492, 2.0
        %v614 = vmul.f32 %v557, 2.0
        %v615 = vmul.f32 %v365, 2.0
        %v616 = vmul.f32 %v430, 2.0
        %v617 = vmul.f32 %v495, 2.0
        %v618 = vmul.f32 %v560, 2.0
        %v619 = vmul.f32 %v368, 2.0
        %v620 = vmul.f32 %v433, 2.0
        %v621 = vmul.f32 %v498, 2.0
        %v622 = vmul.f32 %v563, 2.0
        %v623 = vmul.f32 %v371, 2.0
        %v624 = vmul.f32 %v436, 2.0
        %v625 = vmul.f32 %v501, 2.0
        %v626 = vmul.f32 %v566, 2.0
        %v627 = vmul.f32 %v374, 2.0
        %v628 = vmul.f32 %v439, 2.0
        %v629 = vmul.f32 %v504, 2.0
        %v630 = vmul.f32 %v569, 2.0
        %v631 = vmul.f32 %v377, 2.0
        %v632 = vmul.f32 %v442, 2.0
        %v633 = vmul.f32 %v507, 2.0
        %v634 = vmul.f32 %v572, 2.0
        %v635 = vmul.f32 %v380, 2.0
        %v636 = vmul.f32 %v445, 2.0
        %v637 = vmul.f32 %v510, 2.0
        %v638 = vmul.f32 %v575, 2.0
        %v639 = vmul.f32 %v383, 2.0
        %v640 = vmul.f32 %v448, 2.0
        %v641 = vmul.f32 %v513, 2.0
        %v642 = vmul.f32 %v578, 2.0
        %v643 = vmul.f32 %v386, 2.0
        %v644 = vmul.f32 %v451, 2.0
        %v645 = vmul.f32 %v516, 2.0
        %v646 = vmul.f32 %v581, 2.0
        %648 = vset.pattern.permute.xlu0 0
        %649 = vperm.xlu0 %648, %v258
        %v650 = vpop.permute.xlu0 %649
        %653 = vset.pattern.permute.xlu0 0
        %654 = vperm.xlu0 %653, %v259
        %v655 = vpop.permute.xlu0 %654
        %658 = vset.pattern.permute.xlu0 0
        %659 = vperm.xlu0 %658, %v260
        %v660 = vpop.permute.xlu0 %659
        %663 = vset.pattern.permute.xlu0 0
        %664 = vperm.xlu0 %663, %v261
        %v665 = vpop.permute.xlu0 %664
        %668 = vset.pattern.permute.xlu0 0
        %669 = vperm.xlu0 %668, %v262
        %v670 = vpop.permute.xlu0 %669
        %673 = vset.pattern.permute.xlu0 0
        %674 = vperm.xlu0 %673, %v263
        %v675 = vpop.permute.xlu0 %674
        %678 = vset.pattern.permute.xlu0 0
        %679 = vperm.xlu0 %678, %v264
        %v680 = vpop.permute.xlu0 %679
        %683 = vset.pattern.permute.xlu0 0
        %684 = vperm.xlu0 %683, %v265
        %v685 = vpop.permute.xlu0 %684
        %688 = vset.pattern.permute.xlu0 0
        %689 = vperm.xlu0 %688, %v266
        %v690 = vpop.permute.xlu0 %689
        %693 = vset.pattern.permute.xlu0 0
        %694 = vperm.xlu0 %693, %v267
        %v695 = vpop.permute.xlu0 %694
        %698 = vset.pattern.permute.xlu0 0
        %699 = vperm.xlu0 %698, %v268
        %v700 = vpop.permute.xlu0 %699
        %703 = vset.pattern.permute.xlu0 0
        %704 = vperm.xlu0 %703, %v269
        %v705 = vpop.permute.xlu0 %704
        %708 = vset.pattern.permute.xlu0 0
        %709 = vperm.xlu0 %708, %v270
        %v710 = vpop.permute.xlu0 %709
        %713 = vset.pattern.permute.xlu0 0
        %714 = vperm.xlu0 %713, %v271
        %v715 = vpop.permute.xlu0 %714
        %718 = vset.pattern.permute.xlu0 0
        %719 = vperm.xlu0 %718, %v272
        %v720 = vpop.permute.xlu0 %719
        %723 = vset.pattern.permute.xlu0 0
        %724 = vperm.xlu0 %723, %v273
        %v725 = vpop.permute.xlu0 %724
        %v727 = vsub.f32 %v650, %v583
        %v728 = vsub.f32 %v650, %v584
        %v729 = vsub.f32 %v650, %v585
        %v730 = vsub.f32 %v650, %v586
        %v731 = vsub.f32 %v655, %v587
        %v732 = vsub.f32 %v655, %v588
        %v733 = vsub.f32 %v655, %v589
        %v734 = vsub.f32 %v655, %v590
        %v735 = vsub.f32 %v660, %v591
        %v736 = vsub.f32 %v660, %v592
        %v737 = vsub.f32 %v660, %v593
        %v738 = vsub.f32 %v660, %v594
        %v739 = vsub.f32 %v665, %v595
        %v740 = vsub.f32 %v665, %v596
        %v741 = vsub.f32 %v665, %v597
        %v742 = vsub.f32 %v665, %v598
        %v743 = vsub.f32 %v670, %v599
        %v744 = vsub.f32 %v670, %v600
        %v745 = vsub.f32 %v670, %v601
        %v746 = vsub.f32 %v670, %v602
        %v747 = vsub.f32 %v675, %v603
        %v748 = vsub.f32 %v675, %v604
        %v749 = vsub.f32 %v675, %v605
        %v750 = vsub.f32 %v675, %v606
        %v751 = vsub.f32 %v680, %v607
        %v752 = vsub.f32 %v680, %v608
        %v753 = vsub.f32 %v680, %v609
        %v754 = vsub.f32 %v680, %v610
        %v755 = vsub.f32 %v685, %v611
        %v756 = vsub.f32 %v685, %v612
        %v757 = vsub.f32 %v685, %v613
        %v758 = vsub.f32 %v685, %v614
        %v759 = vsub.f32 %v690, %v615
        %v760 = vsub.f32 %v690, %v616
        %v761 = vsub.f32 %v690, %v617
        %v762 = vsub.f32 %v690, %v618
        %v763 = vsub.f32 %v695, %v619
        %v764 = vsub.f32 %v695, %v620
        %v765 = vsub.f32 %v695, %v621
        %v766 = vsub.f32 %v695, %v622
        %v767 = vsub.f32 %v700, %v623
        %v768 = vsub.f32 %v700, %v624
        %v769 = vsub.f32 %v700, %v625
        %v770 = vsub.f32 %v700, %v626
        %v771 = vsub.f32 %v705, %v627
        %v772 = vsub.f32 %v705, %v628
        %v773 = vsub.f32 %v705, %v629
        %v774 = vsub.f32 %v705, %v630
        %v775 = vsub.f32 %v710, %v631
        %v776 = vsub.f32 %v710, %v632
        %v777 = vsub.f32 %v710, %v633
        %v778 = vsub.f32 %v710, %v634
        %v779 = vsub.f32 %v715, %v635
        %v780 = vsub.f32 %v715, %v636
        %v781 = vsub.f32 %v715, %v637
        %v782 = vsub.f32 %v715, %v638
        %v783 = vsub.f32 %v720, %v639
        %v784 = vsub.f32 %v720, %v640
        %v785 = vsub.f32 %v720, %v641
        %v786 = vsub.f32 %v720, %v642
        %v787 = vsub.f32 %v725, %v643
        %v788 = vsub.f32 %v725, %v644
        %v789 = vsub.f32 %v725, %v645
        %v790 = vsub.f32 %v725, %v646
        %v791 = vmin.f32 %v727, %v731
        %v792 = vmin.f32 %v791, %v735
        %v793 = vmin.f32 %v792, %v739
        %v794 = vmin.f32 %v793, %v743
        %v795 = vmin.f32 %v794, %v747
        %v796 = vmin.f32 %v795, %v751
        %v797 = vmin.f32 %v796, %v755
        %v798 = vmin.f32 %v797, %v759
        %v799 = vmin.f32 %v798, %v763
        %v800 = vmin.f32 %v799, %v767
        %v801 = vmin.f32 %v800, %v771
        %v802 = vmin.f32 %v801, %v775
        %v803 = vmin.f32 %v802, %v779
        %v804 = vmin.f32 %v803, %v783
        %v805 = vmin.f32 %v804, %v787
        %v806 = vrot.slane %v805, 4
        %v807 = vmin.f32 %v805, %v806
        %v808 = vrot.slane %v807, 2
        %v809 = vmin.f32 %v807, %v808
        %v810 = vrot.slane %v809, 1
        %v811 = vmin.f32 %v809, %v810
        %v812 = vmin.f32 %v728, %v732
        %v813 = vmin.f32 %v812, %v736
        %v814 = vmin.f32 %v813, %v740
        %v815 = vmin.f32 %v814, %v744
        %v816 = vmin.f32 %v815, %v748
        %v817 = vmin.f32 %v816, %v752
        %v818 = vmin.f32 %v817, %v756
        %v819 = vmin.f32 %v818, %v760
        %v820 = vmin.f32 %v819, %v764
        %v821 = vmin.f32 %v820, %v768
        %v822 = vmin.f32 %v821, %v772
        %v823 = vmin.f32 %v822, %v776
        %v824 = vmin.f32 %v823, %v780
        %v825 = vmin.f32 %v824, %v784
        %v826 = vmin.f32 %v825, %v788
        %v827 = vrot.slane %v826, 4
        %v828 = vmin.f32 %v826, %v827
        %v829 = vrot.slane %v828, 2
        %v830 = vmin.f32 %v828, %v829
        %v831 = vrot.slane %v830, 1
        %v832 = vmin.f32 %v830, %v831
        %v833 = vmin.f32 %v729, %v733
        %v834 = vmin.f32 %v833, %v737
        %v835 = vmin.f32 %v834, %v741
        %v836 = vmin.f32 %v835, %v745
        %v837 = vmin.f32 %v836, %v749
        %v838 = vmin.f32 %v837, %v753
        %v839 = vmin.f32 %v838, %v757
        %v840 = vmin.f32 %v839, %v761
        %v841 = vmin.f32 %v840, %v765
        %v842 = vmin.f32 %v841, %v769
        %v843 = vmin.f32 %v842, %v773
        %v844 = vmin.f32 %v843, %v777
        %v845 = vmin.f32 %v844, %v781
        %v846 = vmin.f32 %v845, %v785
        %v847 = vmin.f32 %v846, %v789
        %v848 = vrot.slane %v847, 4
        %v849 = vmin.f32 %v847, %v848
        %v850 = vrot.slane %v849, 2
        %v851 = vmin.f32 %v849, %v850
        %v852 = vrot.slane %v851, 1
        %v853 = vmin.f32 %v851, %v852
        %v854 = vmin.f32 %v730, %v734
        %v855 = vmin.f32 %v854, %v738
        %v856 = vmin.f32 %v855, %v742
        %v857 = vmin.f32 %v856, %v746
        %v858 = vmin.f32 %v857, %v750
        %v859 = vmin.f32 %v858, %v754
        %v860 = vmin.f32 %v859, %v758
        %v861 = vmin.f32 %v860, %v762
        %v862 = vmin.f32 %v861, %v766
        %v863 = vmin.f32 %v862, %v770
        %v864 = vmin.f32 %v863, %v774
        %v865 = vmin.f32 %v864, %v778
        %v866 = vmin.f32 %v865, %v782
        %v867 = vmin.f32 %v866, %v786
        %v868 = vmin.f32 %v867, %v790
        %v869 = vrot.slane %v868, 4
        %v870 = vmin.f32 %v868, %v869
        %v871 = vrot.slane %v870, 2
        %v872 = vmin.f32 %v870, %v871
        %v873 = vrot.slane %v872, 1
        %v874 = vmin.f32 %v872, %v873
        %v875 = vlaneseq
        %v876 = vshrl.u32 %v875, 7
        %v877 = vadd.s32 %v876, 8
        %v878 = vadd.s32 %v876, 16
        %v879 = vadd.s32 %v876, 24
        %v880 = vadd.s32 %v876, 32
        %v881 = vadd.s32 %v876, 40
        %v882 = vadd.s32 %v876, 48
        %v883 = vadd.s32 %v876, 56
        %v884 = vadd.s32 %v876, 64
        %v885 = vadd.s32 %v876, 72
        %v886 = vadd.s32 %v876, 80
        %v887 = vadd.s32 %v876, 88
        %v888 = vadd.s32 %v876, 96
        %v889 = vadd.s32 %v876, 104
        %v890 = vadd.s32 %v876, 112
        %v891 = vadd.s32 %v876, 120
        %vm892 = vcmp.eq.f32.partialorder %v727, %v811
        %vm893 = vcmp.eq.f32.partialorder %v728, %v832
        %vm894 = vcmp.eq.f32.partialorder %v729, %v853
        %vm895 = vcmp.eq.f32.partialorder %v730, %v874
        %vm896 = vcmp.eq.f32.partialorder %v731, %v811
        %vm897 = vcmp.eq.f32.partialorder %v732, %v832
        %vm898 = vcmp.eq.f32.partialorder %v733, %v853
        %vm899 = vcmp.eq.f32.partialorder %v734, %v874
        %vm900 = vcmp.eq.f32.partialorder %v735, %v811
        %vm901 = vcmp.eq.f32.partialorder %v736, %v832
        %vm902 = vcmp.eq.f32.partialorder %v737, %v853
        %vm903 = vcmp.eq.f32.partialorder %v738, %v874
        %vm904 = vcmp.eq.f32.partialorder %v739, %v811
        %vm905 = vcmp.eq.f32.partialorder %v740, %v832
        %vm906 = vcmp.eq.f32.partialorder %v741, %v853
        %vm907 = vcmp.eq.f32.partialorder %v742, %v874
        %vm908 = vcmp.eq.f32.partialorder %v743, %v811
        %vm909 = vcmp.eq.f32.partialorder %v744, %v832
        %vm910 = vcmp.eq.f32.partialorder %v745, %v853
        %vm911 = vcmp.eq.f32.partialorder %v746, %v874
        %vm912 = vcmp.eq.f32.partialorder %v747, %v811
        %vm913 = vcmp.eq.f32.partialorder %v748, %v832
        %vm914 = vcmp.eq.f32.partialorder %v749, %v853
        %vm915 = vcmp.eq.f32.partialorder %v750, %v874
        %vm916 = vcmp.eq.f32.partialorder %v751, %v811
        %vm917 = vcmp.eq.f32.partialorder %v752, %v832
        %vm918 = vcmp.eq.f32.partialorder %v753, %v853
        %vm919 = vcmp.eq.f32.partialorder %v754, %v874
        %vm920 = vcmp.eq.f32.partialorder %v755, %v811
        %vm921 = vcmp.eq.f32.partialorder %v756, %v832
        %vm922 = vcmp.eq.f32.partialorder %v757, %v853
        %vm923 = vcmp.eq.f32.partialorder %v758, %v874
        %vm924 = vcmp.eq.f32.partialorder %v759, %v811
        %vm925 = vcmp.eq.f32.partialorder %v760, %v832
        %vm926 = vcmp.eq.f32.partialorder %v761, %v853
        %vm927 = vcmp.eq.f32.partialorder %v762, %v874
        %vm928 = vcmp.eq.f32.partialorder %v763, %v811
        %vm929 = vcmp.eq.f32.partialorder %v764, %v832
        %vm930 = vcmp.eq.f32.partialorder %v765, %v853
        %vm931 = vcmp.eq.f32.partialorder %v766, %v874
        %vm932 = vcmp.eq.f32.partialorder %v767, %v811
        %vm933 = vcmp.eq.f32.partialorder %v768, %v832
        %vm934 = vcmp.eq.f32.partialorder %v769, %v853
        %vm935 = vcmp.eq.f32.partialorder %v770, %v874
        %vm936 = vcmp.eq.f32.partialorder %v771, %v811
        %vm937 = vcmp.eq.f32.partialorder %v772, %v832
        %vm938 = vcmp.eq.f32.partialorder %v773, %v853
        %vm939 = vcmp.eq.f32.partialorder %v774, %v874
        %vm940 = vcmp.eq.f32.partialorder %v775, %v811
        %vm941 = vcmp.eq.f32.partialorder %v776, %v832
        %vm942 = vcmp.eq.f32.partialorder %v777, %v853
        %vm943 = vcmp.eq.f32.partialorder %v778, %v874
        %vm944 = vcmp.eq.f32.partialorder %v779, %v811
        %vm945 = vcmp.eq.f32.partialorder %v780, %v832
        %vm946 = vcmp.eq.f32.partialorder %v781, %v853
        %vm947 = vcmp.eq.f32.partialorder %v782, %v874
        %vm948 = vcmp.eq.f32.partialorder %v783, %v811
        %vm949 = vcmp.eq.f32.partialorder %v784, %v832
        %vm950 = vcmp.eq.f32.partialorder %v785, %v853
        %vm951 = vcmp.eq.f32.partialorder %v786, %v874
        %vm952 = vcmp.eq.f32.partialorder %v787, %v811
        %vm953 = vcmp.eq.f32.partialorder %v788, %v832
        %vm954 = vcmp.eq.f32.partialorder %v789, %v853
        %vm955 = vcmp.eq.f32.partialorder %v790, %v874
        %v956 = vsel %vm892, %v876, 128
        %v957 = vsel %vm893, %v876, 128
        %v958 = vsel %vm894, %v876, 128
        %v959 = vsel %vm895, %v876, 128
        %v960 = vsel %vm896, %v877, 128
        %v961 = vsel %vm897, %v877, 128
        %v962 = vsel %vm898, %v877, 128
        %v963 = vsel %vm899, %v877, 128
        %v964 = vsel %vm900, %v878, 128
        %v965 = vsel %vm901, %v878, 128
        %v966 = vsel %vm902, %v878, 128
        %v967 = vsel %vm903, %v878, 128
        %v968 = vsel %vm904, %v879, 128
        %v969 = vsel %vm905, %v879, 128
        %v970 = vsel %vm906, %v879, 128
        %v971 = vsel %vm907, %v879, 128
        %v972 = vsel %vm908, %v880, 128
        %v973 = vsel %vm909, %v880, 128
        %v974 = vsel %vm910, %v880, 128
        %v975 = vsel %vm911, %v880, 128
        %v976 = vsel %vm912, %v881, 128
        %v977 = vsel %vm913, %v881, 128
        %v978 = vsel %vm914, %v881, 128
        %v979 = vsel %vm915, %v881, 128
        %v980 = vsel %vm916, %v882, 128
        %v981 = vsel %vm917, %v882, 128
        %v982 = vsel %vm918, %v882, 128
        %v983 = vsel %vm919, %v882, 128
        %v984 = vsel %vm920, %v883, 128
        %v985 = vsel %vm921, %v883, 128
        %v986 = vsel %vm922, %v883, 128
        %v987 = vsel %vm923, %v883, 128
        %v988 = vsel %vm924, %v884, 128
        %v989 = vsel %vm925, %v884, 128
        %v990 = vsel %vm926, %v884, 128
        %v991 = vsel %vm927, %v884, 128
        %v992 = vsel %vm928, %v885, 128
        %v993 = vsel %vm929, %v885, 128
        %v994 = vsel %vm930, %v885, 128
        %v995 = vsel %vm931, %v885, 128
        %v996 = vsel %vm932, %v886, 128
        %v997 = vsel %vm933, %v886, 128
        %v998 = vsel %vm934, %v886, 128
        %v999 = vsel %vm935, %v886, 128
        %v1000 = vsel %vm936, %v887, 128
        %v1001 = vsel %vm937, %v887, 128
        %v1002 = vsel %vm938, %v887, 128
        %v1003 = vsel %vm939, %v887, 128
        %v1004 = vsel %vm940, %v888, 128
        %v1005 = vsel %vm941, %v888, 128
        %v1006 = vsel %vm942, %v888, 128
        %v1007 = vsel %vm943, %v888, 128
        %v1008 = vsel %vm944, %v889, 128
        %v1009 = vsel %vm945, %v889, 128
        %v1010 = vsel %vm946, %v889, 128
        %v1011 = vsel %vm947, %v889, 128
        %v1012 = vsel %vm948, %v890, 128
        %v1013 = vsel %vm949, %v890, 128
        %v1014 = vsel %vm950, %v890, 128
        %v1015 = vsel %vm951, %v890, 128
        %v1016 = vsel %vm952, %v891, 128
        %v1017 = vsel %vm953, %v891, 128
        %v1018 = vsel %vm954, %v891, 128
        %v1019 = vsel %vm955, %v891, 128
        %vm1020 = vcmp.lt.s32.totalorder %v956, %v960
        %v1021 = vsel %vm1020, %v956, %v960
        %vm1022 = vcmp.lt.s32.totalorder %v1021, %v964
        %v1023 = vsel %vm1022, %v1021, %v964
        %vm1024 = vcmp.lt.s32.totalorder %v1023, %v968
        %v1025 = vsel %vm1024, %v1023, %v968
        %vm1026 = vcmp.lt.s32.totalorder %v1025, %v972
        %v1027 = vsel %vm1026, %v1025, %v972
        %vm1028 = vcmp.lt.s32.totalorder %v1027, %v976
        %v1029 = vsel %vm1028, %v1027, %v976
        %vm1030 = vcmp.lt.s32.totalorder %v1029, %v980
        %v1031 = vsel %vm1030, %v1029, %v980
        %vm1032 = vcmp.lt.s32.totalorder %v1031, %v984
        %v1033 = vsel %vm1032, %v1031, %v984
        %vm1034 = vcmp.lt.s32.totalorder %v1033, %v988
        %v1035 = vsel %vm1034, %v1033, %v988
        %vm1036 = vcmp.lt.s32.totalorder %v1035, %v992
        %v1037 = vsel %vm1036, %v1035, %v992
        %vm1038 = vcmp.lt.s32.totalorder %v1037, %v996
        %v1039 = vsel %vm1038, %v1037, %v996
        %vm1040 = vcmp.lt.s32.totalorder %v1039, %v1000
        %v1041 = vsel %vm1040, %v1039, %v1000
        %vm1042 = vcmp.lt.s32.totalorder %v1041, %v1004
        %v1043 = vsel %vm1042, %v1041, %v1004
        %vm1044 = vcmp.lt.s32.totalorder %v1043, %v1008
        %v1045 = vsel %vm1044, %v1043, %v1008
        %vm1046 = vcmp.lt.s32.totalorder %v1045, %v1012
        %v1047 = vsel %vm1046, %v1045, %v1012
        %vm1048 = vcmp.lt.s32.totalorder %v1047, %v1016
        %v1049 = vsel %vm1048, %v1047, %v1016
        %v1050 = vrot.slane %v1049, 4
        %vm1051 = vcmp.lt.s32.totalorder %v1049, %v1050
        %v1052 = vsel %vm1051, %v1049, %v1050
        %v1053 = vrot.slane %v1052, 2
        %vm1054 = vcmp.lt.s32.totalorder %v1052, %v1053
        %v1055 = vsel %vm1054, %v1052, %v1053
        %v1056 = vrot.slane %v1055, 1
        %vm1057 = vcmp.lt.s32.totalorder %v1055, %v1056
        %v1058 = vsel %vm1057, %v1055, %v1056
        %vm1059 = vcmp.lt.s32.totalorder %v957, %v961
        %v1060 = vsel %vm1059, %v957, %v961
        %vm1061 = vcmp.lt.s32.totalorder %v1060, %v965
        %v1062 = vsel %vm1061, %v1060, %v965
        %vm1063 = vcmp.lt.s32.totalorder %v1062, %v969
        %v1064 = vsel %vm1063, %v1062, %v969
        %vm1065 = vcmp.lt.s32.totalorder %v1064, %v973
        %v1066 = vsel %vm1065, %v1064, %v973
        %vm1067 = vcmp.lt.s32.totalorder %v1066, %v977
        %v1068 = vsel %vm1067, %v1066, %v977
        %vm1069 = vcmp.lt.s32.totalorder %v1068, %v981
        %v1070 = vsel %vm1069, %v1068, %v981
        %vm1071 = vcmp.lt.s32.totalorder %v1070, %v985
        %v1072 = vsel %vm1071, %v1070, %v985
        %vm1073 = vcmp.lt.s32.totalorder %v1072, %v989
        %v1074 = vsel %vm1073, %v1072, %v989
        %vm1075 = vcmp.lt.s32.totalorder %v1074, %v993
        %v1076 = vsel %vm1075, %v1074, %v993
        %vm1077 = vcmp.lt.s32.totalorder %v1076, %v997
        %v1078 = vsel %vm1077, %v1076, %v997
        %vm1079 = vcmp.lt.s32.totalorder %v1078, %v1001
        %v1080 = vsel %vm1079, %v1078, %v1001
        %vm1081 = vcmp.lt.s32.totalorder %v1080, %v1005
        %v1082 = vsel %vm1081, %v1080, %v1005
        %vm1083 = vcmp.lt.s32.totalorder %v1082, %v1009
        %v1084 = vsel %vm1083, %v1082, %v1009
        %vm1085 = vcmp.lt.s32.totalorder %v1084, %v1013
        %v1086 = vsel %vm1085, %v1084, %v1013
        %vm1087 = vcmp.lt.s32.totalorder %v1086, %v1017
        %v1088 = vsel %vm1087, %v1086, %v1017
        %v1089 = vrot.slane %v1088, 4
        %vm1090 = vcmp.lt.s32.totalorder %v1088, %v1089
        %v1091 = vsel %vm1090, %v1088, %v1089
        %v1092 = vrot.slane %v1091, 2
        %vm1093 = vcmp.lt.s32.totalorder %v1091, %v1092
        %v1094 = vsel %vm1093, %v1091, %v1092
        %v1095 = vrot.slane %v1094, 1
        %vm1096 = vcmp.lt.s32.totalorder %v1094, %v1095
        %v1097 = vsel %vm1096, %v1094, %v1095
        %vm1098 = vcmp.lt.s32.totalorder %v958, %v962
        %v1099 = vsel %vm1098, %v958, %v962
        %vm1100 = vcmp.lt.s32.totalorder %v1099, %v966
        %v1101 = vsel %vm1100, %v1099, %v966
        %vm1102 = vcmp.lt.s32.totalorder %v1101, %v970
        %v1103 = vsel %vm1102, %v1101, %v970
        %vm1104 = vcmp.lt.s32.totalorder %v1103, %v974
        %v1105 = vsel %vm1104, %v1103, %v974
        %vm1106 = vcmp.lt.s32.totalorder %v1105, %v978
        %v1107 = vsel %vm1106, %v1105, %v978
        %vm1108 = vcmp.lt.s32.totalorder %v1107, %v982
        %v1109 = vsel %vm1108, %v1107, %v982
        %vm1110 = vcmp.lt.s32.totalorder %v1109, %v986
        %v1111 = vsel %vm1110, %v1109, %v986
        %vm1112 = vcmp.lt.s32.totalorder %v1111, %v990
        %v1113 = vsel %vm1112, %v1111, %v990
        %vm1114 = vcmp.lt.s32.totalorder %v1113, %v994
        %v1115 = vsel %vm1114, %v1113, %v994
        %vm1116 = vcmp.lt.s32.totalorder %v1115, %v998
        %v1117 = vsel %vm1116, %v1115, %v998
        %vm1118 = vcmp.lt.s32.totalorder %v1117, %v1002
        %v1119 = vsel %vm1118, %v1117, %v1002
        %vm1120 = vcmp.lt.s32.totalorder %v1119, %v1006
        %v1121 = vsel %vm1120, %v1119, %v1006
        %vm1122 = vcmp.lt.s32.totalorder %v1121, %v1010
        %v1123 = vsel %vm1122, %v1121, %v1010
        %vm1124 = vcmp.lt.s32.totalorder %v1123, %v1014
        %v1125 = vsel %vm1124, %v1123, %v1014
        %vm1126 = vcmp.lt.s32.totalorder %v1125, %v1018
        %v1127 = vsel %vm1126, %v1125, %v1018
        %v1128 = vrot.slane %v1127, 4
        %vm1129 = vcmp.lt.s32.totalorder %v1127, %v1128
        %v1130 = vsel %vm1129, %v1127, %v1128
        %v1131 = vrot.slane %v1130, 2
        %vm1132 = vcmp.lt.s32.totalorder %v1130, %v1131
        %v1133 = vsel %vm1132, %v1130, %v1131
        %v1134 = vrot.slane %v1133, 1
        %vm1135 = vcmp.lt.s32.totalorder %v1133, %v1134
        %v1136 = vsel %vm1135, %v1133, %v1134
        %vm1137 = vcmp.lt.s32.totalorder %v959, %v963
        %v1138 = vsel %vm1137, %v959, %v963
        %vm1139 = vcmp.lt.s32.totalorder %v1138, %v967
        %v1140 = vsel %vm1139, %v1138, %v967
        %vm1141 = vcmp.lt.s32.totalorder %v1140, %v971
        %v1142 = vsel %vm1141, %v1140, %v971
        %vm1143 = vcmp.lt.s32.totalorder %v1142, %v975
        %v1144 = vsel %vm1143, %v1142, %v975
        %vm1145 = vcmp.lt.s32.totalorder %v1144, %v979
        %v1146 = vsel %vm1145, %v1144, %v979
        %vm1147 = vcmp.lt.s32.totalorder %v1146, %v983
        %v1148 = vsel %vm1147, %v1146, %v983
        %vm1149 = vcmp.lt.s32.totalorder %v1148, %v987
        %v1150 = vsel %vm1149, %v1148, %v987
        %vm1151 = vcmp.lt.s32.totalorder %v1150, %v991
        %v1152 = vsel %vm1151, %v1150, %v991
        %vm1153 = vcmp.lt.s32.totalorder %v1152, %v995
        %v1154 = vsel %vm1153, %v1152, %v995
        %vm1155 = vcmp.lt.s32.totalorder %v1154, %v999
        %v1156 = vsel %vm1155, %v1154, %v999
        %vm1157 = vcmp.lt.s32.totalorder %v1156, %v1003
        %v1158 = vsel %vm1157, %v1156, %v1003
        %vm1159 = vcmp.lt.s32.totalorder %v1158, %v1007
        %v1160 = vsel %vm1159, %v1158, %v1007
        %vm1161 = vcmp.lt.s32.totalorder %v1160, %v1011
        %v1162 = vsel %vm1161, %v1160, %v1011
        %vm1163 = vcmp.lt.s32.totalorder %v1162, %v1015
        %v1164 = vsel %vm1163, %v1162, %v1015
        %vm1165 = vcmp.lt.s32.totalorder %v1164, %v1019
        %v1166 = vsel %vm1165, %v1164, %v1019
        %v1167 = vrot.slane %v1166, 4
        %vm1168 = vcmp.lt.s32.totalorder %v1166, %v1167
        %v1169 = vsel %vm1168, %v1166, %v1167
        %v1170 = vrot.slane %v1169, 2
        %vm1171 = vcmp.lt.s32.totalorder %v1169, %v1170
        %v1172 = vsel %vm1171, %v1169, %v1170
        %v1173 = vrot.slane %v1172, 1
        %vm1174 = vcmp.lt.s32.totalorder %v1172, %v1173
        %v1175 = vsel %vm1174, %v1172, %v1173
        %v1176 = vrot.slane %v1097, 7
        %v1177 = vrot.slane %v1136, 6
        %v1178 = vrot.slane %v1175, 5
        %vm1179 = vcmask 1040384
        %v1180 = vsel %vm1179, %v1058, %v1176
        %vm1181 = vcmask 1042434
        %v1182 = vsel %vm1181, %v1177, %v1178
        %vm1183 = vcmask 1041408
        %v1184 = vsel %vm1183, %v1180, %v1182
        %v1185 = vlaneseq
        %vm1186 = vcmp.ge.s32.totalorder %v1185, 0
        %vm1187 = vcmp.lt.s32.totalorder %v1185, 512
        %vm1188 = vmand %vm1186, %vm1187
        %1189 = vst.msk [vmem:[%s229] sm:$0xf] %vm1188, %v1184
        %vm1190 = vcmp.eq.s32.totalorder %v876, %v1058
        %vm1191 = vcmp.eq.s32.totalorder %v876, %v1097
        %vm1192 = vcmp.eq.s32.totalorder %v876, %v1136
        %vm1193 = vcmp.eq.s32.totalorder %v876, %v1175
        %vm1194 = vcmp.eq.s32.totalorder %v877, %v1058
        %vm1195 = vcmp.eq.s32.totalorder %v877, %v1097
        %vm1196 = vcmp.eq.s32.totalorder %v877, %v1136
        %vm1197 = vcmp.eq.s32.totalorder %v877, %v1175
        %vm1198 = vcmp.eq.s32.totalorder %v878, %v1058
        %vm1199 = vcmp.eq.s32.totalorder %v878, %v1097
        %vm1200 = vcmp.eq.s32.totalorder %v878, %v1136
        %vm1201 = vcmp.eq.s32.totalorder %v878, %v1175
        %vm1202 = vcmp.eq.s32.totalorder %v879, %v1058
        %vm1203 = vcmp.eq.s32.totalorder %v879, %v1097
        %vm1204 = vcmp.eq.s32.totalorder %v879, %v1136
        %vm1205 = vcmp.eq.s32.totalorder %v879, %v1175
        %vm1206 = vcmp.eq.s32.totalorder %v880, %v1058
        %vm1207 = vcmp.eq.s32.totalorder %v880, %v1097
        %vm1208 = vcmp.eq.s32.totalorder %v880, %v1136
        %vm1209 = vcmp.eq.s32.totalorder %v880, %v1175
        %vm1210 = vcmp.eq.s32.totalorder %v881, %v1058
        %vm1211 = vcmp.eq.s32.totalorder %v881, %v1097
        %vm1212 = vcmp.eq.s32.totalorder %v881, %v1136
        %vm1213 = vcmp.eq.s32.totalorder %v881, %v1175
        %vm1214 = vcmp.eq.s32.totalorder %v882, %v1058
        %vm1215 = vcmp.eq.s32.totalorder %v882, %v1097
        %vm1216 = vcmp.eq.s32.totalorder %v882, %v1136
        %vm1217 = vcmp.eq.s32.totalorder %v882, %v1175
        %vm1218 = vcmp.eq.s32.totalorder %v883, %v1058
        %vm1219 = vcmp.eq.s32.totalorder %v883, %v1097
        %vm1220 = vcmp.eq.s32.totalorder %v883, %v1136
        %vm1221 = vcmp.eq.s32.totalorder %v883, %v1175
        %vm1222 = vcmp.eq.s32.totalorder %v884, %v1058
        %vm1223 = vcmp.eq.s32.totalorder %v884, %v1097
        %vm1224 = vcmp.eq.s32.totalorder %v884, %v1136
        %vm1225 = vcmp.eq.s32.totalorder %v884, %v1175
        %vm1226 = vcmp.eq.s32.totalorder %v885, %v1058
        %vm1227 = vcmp.eq.s32.totalorder %v885, %v1097
        %vm1228 = vcmp.eq.s32.totalorder %v885, %v1136
        %vm1229 = vcmp.eq.s32.totalorder %v885, %v1175
        %vm1230 = vcmp.eq.s32.totalorder %v886, %v1058
        %vm1231 = vcmp.eq.s32.totalorder %v886, %v1097
        %vm1232 = vcmp.eq.s32.totalorder %v886, %v1136
        %vm1233 = vcmp.eq.s32.totalorder %v886, %v1175
        %vm1234 = vcmp.eq.s32.totalorder %v887, %v1058
        %vm1235 = vcmp.eq.s32.totalorder %v887, %v1097
        %vm1236 = vcmp.eq.s32.totalorder %v887, %v1136
        %vm1237 = vcmp.eq.s32.totalorder %v887, %v1175
        %vm1238 = vcmp.eq.s32.totalorder %v888, %v1058
        %vm1239 = vcmp.eq.s32.totalorder %v888, %v1097
        %vm1240 = vcmp.eq.s32.totalorder %v888, %v1136
        %vm1241 = vcmp.eq.s32.totalorder %v888, %v1175
        %vm1242 = vcmp.eq.s32.totalorder %v889, %v1058
        %vm1243 = vcmp.eq.s32.totalorder %v889, %v1097
        %vm1244 = vcmp.eq.s32.totalorder %v889, %v1136
        %vm1245 = vcmp.eq.s32.totalorder %v889, %v1175
        %vm1246 = vcmp.eq.s32.totalorder %v890, %v1058
        %vm1247 = vcmp.eq.s32.totalorder %v890, %v1097
        %vm1248 = vcmp.eq.s32.totalorder %v890, %v1136
        %vm1249 = vcmp.eq.s32.totalorder %v890, %v1175
        %vm1250 = vcmp.eq.s32.totalorder %v891, %v1058
        %vm1251 = vcmp.eq.s32.totalorder %v891, %v1097
        %vm1252 = vcmp.eq.s32.totalorder %v891, %v1136
        %vm1253 = vcmp.eq.s32.totalorder %v891, %v1175
        %v1254 = vsel %vm1190, 1, 0
        %v1255 = vsel %vm1191, 1, 0
        %v1256 = vsel %vm1192, 1, 0
        %v1257 = vsel %vm1193, 1, 0
        %v1258 = vsel %vm1194, 1, 0
        %v1259 = vsel %vm1195, 1, 0
        %v1260 = vsel %vm1196, 1, 0
        %v1261 = vsel %vm1197, 1, 0
        %v1262 = vsel %vm1198, 1, 0
        %v1263 = vsel %vm1199, 1, 0
        %v1264 = vsel %vm1200, 1, 0
        %v1265 = vsel %vm1201, 1, 0
        %v1266 = vsel %vm1202, 1, 0
        %v1267 = vsel %vm1203, 1, 0
        %v1268 = vsel %vm1204, 1, 0
        %v1269 = vsel %vm1205, 1, 0
        %v1270 = vsel %vm1206, 1, 0
        %v1271 = vsel %vm1207, 1, 0
        %v1272 = vsel %vm1208, 1, 0
        %v1273 = vsel %vm1209, 1, 0
        %v1274 = vsel %vm1210, 1, 0
        %v1275 = vsel %vm1211, 1, 0
        %v1276 = vsel %vm1212, 1, 0
        %v1277 = vsel %vm1213, 1, 0
        %v1278 = vsel %vm1214, 1, 0
        %v1279 = vsel %vm1215, 1, 0
        %v1280 = vsel %vm1216, 1, 0
        %v1281 = vsel %vm1217, 1, 0
        %v1282 = vsel %vm1218, 1, 0
        %v1283 = vsel %vm1219, 1, 0
        %v1284 = vsel %vm1220, 1, 0
        %v1285 = vsel %vm1221, 1, 0
        %v1286 = vsel %vm1222, 1, 0
        %v1287 = vsel %vm1223, 1, 0
        %v1288 = vsel %vm1224, 1, 0
        %v1289 = vsel %vm1225, 1, 0
        %v1290 = vsel %vm1226, 1, 0
        %v1291 = vsel %vm1227, 1, 0
        %v1292 = vsel %vm1228, 1, 0
        %v1293 = vsel %vm1229, 1, 0
        %v1294 = vsel %vm1230, 1, 0
        %v1295 = vsel %vm1231, 1, 0
        %v1296 = vsel %vm1232, 1, 0
        %v1297 = vsel %vm1233, 1, 0
        %v1298 = vsel %vm1234, 1, 0
        %v1299 = vsel %vm1235, 1, 0
        %v1300 = vsel %vm1236, 1, 0
        %v1301 = vsel %vm1237, 1, 0
        %v1302 = vsel %vm1238, 1, 0
        %v1303 = vsel %vm1239, 1, 0
        %v1304 = vsel %vm1240, 1, 0
        %v1305 = vsel %vm1241, 1, 0
        %v1306 = vsel %vm1242, 1, 0
        %v1307 = vsel %vm1243, 1, 0
        %v1308 = vsel %vm1244, 1, 0
        %v1309 = vsel %vm1245, 1, 0
        %v1310 = vsel %vm1246, 1, 0
        %v1311 = vsel %vm1247, 1, 0
        %v1312 = vsel %vm1248, 1, 0
        %v1313 = vsel %vm1249, 1, 0
        %v1314 = vsel %vm1250, 1, 0
        %v1315 = vsel %vm1251, 1, 0
        %v1316 = vsel %vm1252, 1, 0
        %v1317 = vsel %vm1253, 1, 0
        %v1318 = vcvt.s32.f32 %v1254
        %v1319 = vcvt.s32.f32 %v1255
        %v1320 = vcvt.s32.f32 %v1256
        %v1321 = vcvt.s32.f32 %v1257
        %v1322 = vcvt.s32.f32 %v1258
        %v1323 = vcvt.s32.f32 %v1259
        %v1324 = vcvt.s32.f32 %v1260
        %v1325 = vcvt.s32.f32 %v1261
        %v1326 = vcvt.s32.f32 %v1262
        %v1327 = vcvt.s32.f32 %v1263
        %v1328 = vcvt.s32.f32 %v1264
        %v1329 = vcvt.s32.f32 %v1265
        %v1330 = vcvt.s32.f32 %v1266
        %v1331 = vcvt.s32.f32 %v1267
        %v1332 = vcvt.s32.f32 %v1268
        %v1333 = vcvt.s32.f32 %v1269
        %v1334 = vcvt.s32.f32 %v1270
        %v1335 = vcvt.s32.f32 %v1271
        %v1336 = vcvt.s32.f32 %v1272
        %v1337 = vcvt.s32.f32 %v1273
        %v1338 = vcvt.s32.f32 %v1274
        %v1339 = vcvt.s32.f32 %v1275
        %v1340 = vcvt.s32.f32 %v1276
        %v1341 = vcvt.s32.f32 %v1277
        %v1342 = vcvt.s32.f32 %v1278
        %v1343 = vcvt.s32.f32 %v1279
        %v1344 = vcvt.s32.f32 %v1280
        %v1345 = vcvt.s32.f32 %v1281
        %v1346 = vcvt.s32.f32 %v1282
        %v1347 = vcvt.s32.f32 %v1283
        %v1348 = vcvt.s32.f32 %v1284
        %v1349 = vcvt.s32.f32 %v1285
        %v1350 = vcvt.s32.f32 %v1286
        %v1351 = vcvt.s32.f32 %v1287
        %v1352 = vcvt.s32.f32 %v1288
        %v1353 = vcvt.s32.f32 %v1289
        %v1354 = vcvt.s32.f32 %v1290
        %v1355 = vcvt.s32.f32 %v1291
        %v1356 = vcvt.s32.f32 %v1292
        %v1357 = vcvt.s32.f32 %v1293
        %v1358 = vcvt.s32.f32 %v1294
        %v1359 = vcvt.s32.f32 %v1295
        %v1360 = vcvt.s32.f32 %v1296
        %v1361 = vcvt.s32.f32 %v1297
        %v1362 = vcvt.s32.f32 %v1298
        %v1363 = vcvt.s32.f32 %v1299
        %v1364 = vcvt.s32.f32 %v1300
        %v1365 = vcvt.s32.f32 %v1301
        %v1366 = vcvt.s32.f32 %v1302
        %v1367 = vcvt.s32.f32 %v1303
        %v1368 = vcvt.s32.f32 %v1304
        %v1369 = vcvt.s32.f32 %v1305
        %v1370 = vcvt.s32.f32 %v1306
        %v1371 = vcvt.s32.f32 %v1307
        %v1372 = vcvt.s32.f32 %v1308
        %v1373 = vcvt.s32.f32 %v1309
        %v1374 = vcvt.s32.f32 %v1310
        %v1375 = vcvt.s32.f32 %v1311
        %v1376 = vcvt.s32.f32 %v1312
        %v1377 = vcvt.s32.f32 %v1313
        %v1378 = vcvt.s32.f32 %v1314
        %v1379 = vcvt.s32.f32 %v1315
        %v1380 = vcvt.s32.f32 %v1316
        %v1381 = vcvt.s32.f32 %v1317
        %v1382 = vld [vmem:[%s2] sm:$0xff]
        %1383 = vmatpush.msra.mxu0 %v1378
        %1384 = vmatpush.msra.mxu0 %v1374
        %1385 = vmatpush.msra.mxu0 %v1370
        %1386 = vmatpush.msra.mxu0 %v1366
        %1387 = vmatpush.msra.mxu0 %v1362
        %1388 = vmatpush.msra.mxu0 %v1358
        %1389 = vmatpush.msra.mxu0 %v1354
        %1390 = vmatpush.msra.mxu0 %v1350
        %1391 = vmatpush.msra.mxu0 %v1346
        %1392 = vmatpush.msra.mxu0 %v1342
        %1393 = vmatpush.msra.mxu0 %v1338
        %1394 = vmatpush.msra.mxu0 %v1334
        %1395 = vmatpush.msra.mxu0 %v1330
        %1396 = vmatpush.msra.mxu0 %v1326
        %1397 = vmatpush.msra.mxu0 %v1322
        %1398 = vmatpush.msra.mxu0 %v1318
        %1399 = vmatmul.f32.gmra.mxu0 %v1382
        %v1400 = vpop.f32.mrf.mxu0
        %v1401 = vadd.f32 0.0, %v1400
        %1402 = vdwg.mxu0
        %1403 = vmatpush.msra.mxu0 %v1379
        %1404 = vmatpush.msra.mxu0 %v1375
        %1405 = vmatpush.msra.mxu0 %v1371
        %1406 = vmatpush.msra.mxu0 %v1367
        %1407 = vmatpush.msra.mxu0 %v1363
        %1408 = vmatpush.msra.mxu0 %v1359
        %1409 = vmatpush.msra.mxu0 %v1355
        %1410 = vmatpush.msra.mxu0 %v1351
        %1411 = vmatpush.msra.mxu0 %v1347
        %1412 = vmatpush.msra.mxu0 %v1343
        %1413 = vmatpush.msra.mxu0 %v1339
        %1414 = vmatpush.msra.mxu0 %v1335
        %1415 = vmatpush.msra.mxu0 %v1331
        %1416 = vmatpush.msra.mxu0 %v1327
        %1417 = vmatpush.msra.mxu0 %v1323
        %1418 = vmatpush.msra.mxu0 %v1319
        %1419 = vmatmul.f32.gmra.mxu0 %v1382
        %v1420 = vpop.f32.mrf.mxu0
        %v1421 = vadd.f32 0.0, %v1420
        %1422 = vdwg.mxu0
        %1423 = vmatpush.msra.mxu0 %v1380
        %1424 = vmatpush.msra.mxu0 %v1376
        %1425 = vmatpush.msra.mxu0 %v1372
        %1426 = vmatpush.msra.mxu0 %v1368
        %1427 = vmatpush.msra.mxu0 %v1364
        %1428 = vmatpush.msra.mxu0 %v1360
        %1429 = vmatpush.msra.mxu0 %v1356
        %1430 = vmatpush.msra.mxu0 %v1352
        %1431 = vmatpush.msra.mxu0 %v1348
        %1432 = vmatpush.msra.mxu0 %v1344
        %1433 = vmatpush.msra.mxu0 %v1340
        %1434 = vmatpush.msra.mxu0 %v1336
        %1435 = vmatpush.msra.mxu0 %v1332
        %1436 = vmatpush.msra.mxu0 %v1328
        %1437 = vmatpush.msra.mxu0 %v1324
        %1438 = vmatpush.msra.mxu0 %v1320
        %1439 = vmatmul.f32.gmra.mxu0 %v1382
        %v1440 = vpop.f32.mrf.mxu0
        %v1441 = vadd.f32 0.0, %v1440
        %1442 = vdwg.mxu0
        %1443 = vmatpush.msra.mxu0 %v1381
        %1444 = vmatpush.msra.mxu0 %v1377
        %1445 = vmatpush.msra.mxu0 %v1373
        %1446 = vmatpush.msra.mxu0 %v1369
        %1447 = vmatpush.msra.mxu0 %v1365
        %1448 = vmatpush.msra.mxu0 %v1361
        %1449 = vmatpush.msra.mxu0 %v1357
        %1450 = vmatpush.msra.mxu0 %v1353
        %1451 = vmatpush.msra.mxu0 %v1349
        %1452 = vmatpush.msra.mxu0 %v1345
        %1453 = vmatpush.msra.mxu0 %v1341
        %1454 = vmatpush.msra.mxu0 %v1337
        %1455 = vmatpush.msra.mxu0 %v1333
        %1456 = vmatpush.msra.mxu0 %v1329
        %1457 = vmatpush.msra.mxu0 %v1325
        %1458 = vmatpush.msra.mxu0 %v1321
        %1459 = vmatmul.f32.gmra.mxu0 %v1382
        %v1460 = vpop.f32.mrf.mxu0
        %v1461 = vadd.f32 0.0, %v1460
        %1462 = vdwg.mxu0
        %1463 = vst [vmem:[%s222] sm:$0xff] %v1401
        %1464 = vst [vmem:[%s222 + $0x8] sm:$0xff] %v1421
        %1465 = vst [vmem:[%s222 + $0x10] sm:$0xff] %v1441
        %1466 = vst [vmem:[%s222 + $0x18] sm:$0xff] %v1461
        %s1467 = sand.u32 %s120, 1
        %s1468 = scalar_lea.sflag [#allocation3], %s1467
        %s1469 = sand.u32 %s120, 1
        %s1470 = smul.addr %s1469, 32
        %s1471 = scalar_lea.vmem [#allocation2], %s1470
        %s1472 = sand.u32 %s146, 1
        %s1473 = scalar_lea.sflag [#allocation5], %s1472
        %s1474 = sand.u32 %s146, 1
        %s1475 = smul.addr %s1474, 4
        %s1476 = scalar_lea.vmem [#allocation4], %s1475
        // Predicated region
        $region37: #{tpu_custom_call.1} parent=35 // pred_check
          %p1477 = pneg %p130
        $region38: #{tpu_custom_call.1} parent=35 // pred_check_branch
          %1479 = sbr.rel (%p1477) target = $region40
        $region39: #{tpu_custom_call.1} parent=35 // pred_region
          %s1480 = smul.u32 4, %s23
          %1482 = vsyncadd %s1468, 0
          %s1483 = smul.addr %s1480, 8
          %s1484 = scalar_lea.hbm %s4, %s1483
          %s1486 = sshll.u32 %s1471, 4
          %s1487 = int_to_ptr.vmem [resolvable:$true] %s1486
          %s1488 = sshll.u32 %s1484, 4
          %s1489 = int_to_ptr.hbm [resolvable:$true] %s1488
          %1491 = dma.vmem_to_hbm [thread:$0]  %s1487, 512, %s1489, %s1468
        $region40: #{tpu_custom_call.1} parent=35 // pred_fallthru
          _
        // Predicated region
        $region41: #{tpu_custom_call.1} parent=35 // pred_check
          %p1492 = pneg %p156
        $region42: #{tpu_custom_call.1} parent=35 // pred_check_branch
          %1494 = sbr.rel (%p1492) target = $region44
        $region43: #{tpu_custom_call.1} parent=35 // pred_region
          %s1495 = smul.u32 4, %s23
          %1497 = vsyncadd %s1473, 0
          %s1498 = scalar_lea.hbm %s5, %s1495
          %s1500 = sshll.u32 %s1476, 4
          %s1501 = int_to_ptr.vmem [resolvable:$true] %s1500
          %s1502 = sshll.u32 %s1498, 4
          %s1503 = int_to_ptr.hbm [resolvable:$true] %s1502
          %1505 = dma.vmem_to_hbm [thread:$0]  %s1501, 64, %s1503, %s1473
        $region44: #{tpu_custom_call.1} parent=35 // pred_fallthru
          _
      $region36: #{tpu_custom_call.1} parent=5 // pred_fallthru
        _
      %p1506 = scmp.le.s32.totalorder 2, %s18
      // Predicated region
      $region45: #{tpu_custom_call.1} parent=5 // pred_check
        %p1507 = pneg %p1506
      $region46: #{tpu_custom_call.1} parent=5 // pred_check_branch
        %1509 = sbr.rel (%p1507) target = $region48
      $region47: #{tpu_custom_call.1} parent=5 // pred_region
        %s1510 = ssub.s32 %s18, 2
        // Predicated region
        $region49: #{tpu_custom_call.1} parent=47 // pred_check
          %p1511 = pneg %p136
        $region50: #{tpu_custom_call.1} parent=47 // pred_check_branch
          %1513 = sbr.rel (%p1511) target = $region52
        $region51: #{tpu_custom_call.1} parent=47 // pred_region
          %s1514 = sand.u32 %s121, 1
          %s1515 = scalar_lea.sflag [#allocation3], %s1514
          %s1516 = sand.u32 %s121, 1
          %s1517 = smul.addr %s1516, 32
          %s1518 = scalar_lea.vmem [#allocation2], %s1517
          %1520 = dma.done %s1515, 512
        $region52: #{tpu_custom_call.1} parent=47 // pred_fallthru
          _
        // Predicated region
        $region53: #{tpu_custom_call.1} parent=47 // pred_check
          %p1521 = pneg %p162
        $region54: #{tpu_custom_call.1} parent=47 // pred_check_branch
          %1523 = sbr.rel (%p1521) target = $region56
        $region55: #{tpu_custom_call.1} parent=47 // pred_region
          %s1524 = sand.u32 %s147, 1
          %s1525 = scalar_lea.sflag [#allocation5], %s1524
          %s1526 = sand.u32 %s147, 1
          %s1527 = smul.addr %s1526, 4
          %s1528 = scalar_lea.vmem [#allocation4], %s1527
          %1530 = dma.done %s1525, 64
        $region56: #{tpu_custom_call.1} parent=47 // pred_fallthru
          _
      $region48: #{tpu_custom_call.1} parent=5 // pred_fallthru
        _
    $region6: #{tpu_custom_call.1} parent=1 // loop_footer
      %s22 = sadd.s32 1, %s18
    $region7: #{tpu_custom_call.1} parent=1 // loop_footer_branch
      %17 = sbr.rel target = $region3
    $region8: #{tpu_custom_call.1} parent=1 // loop_exit
      _
    %1531 = vsyncpa [#allocation3], 1
    %s1532 = scalar_lea.sflag [#allocation3], 1
    %1533 = vsyncpa %s1532, 1
    %1534 = vsyncpa [#allocation5], 1
    %s1535 = scalar_lea.sflag [#allocation5], 1
    %1536 = vsyncpa %s1535, 1

</llo_original>
